<compile_context>
chip_gen: v7x
topology: tpu7x:2x2x1
jax: 0.10.0
libtpu: 0.0.40
codegen_flags: <defaults>
</compile_context>

<pallas_src>
import functools

import jax
import jax.numpy as jnp
from jax.scipy.linalg import block_diag
from jax.experimental import pallas as pl
from jax.experimental.pallas import tpu as pltpu

BN_EPS = 1e-5
LANE = 128


# ----------------------------------------------------------------------------
# In-kernel helpers
# ----------------------------------------------------------------------------
def _dot(a, b):
    # Default precision (single MXU pass) per perf review; f32 accumulate.
    return jnp.dot(a, b, preferred_element_type=jnp.float32)


def _bn_relu(y, gamma, beta):
    """Training-mode BatchNorm1d (biased var) folded into scale/shift, + ReLU.

    The preceding Linear bias is omitted by the caller: it is a per-column
    constant and cancels against the batch mean.
    """
    mean = jnp.mean(y, axis=0, keepdims=True)
    msq = jnp.mean(y * y, axis=0, keepdims=True)
    var = msq - mean * mean
    s = gamma * jax.lax.rsqrt(var + BN_EPS)
    shift = beta - mean * s
    return jnp.maximum(y * s + shift, 0.0)


# ----------------------------------------------------------------------------
# Single fused forward kernel
# ----------------------------------------------------------------------------
def _fused_vae_kernel(act_ref, vec_ref, ew1_ref, ew2_ref, mulv_ref, intw_ref,
                      zint_ref, c2w_ref, c3w_ref, d2w_ref, d3w_ref, out_ref,
                      *, T, latent_dim):
    L = latent_dim
    e1 = 64 * T          # encoder hidden-1 / decoder hidden-2 width
    e2 = 32 * T          # encoder hidden-2 / decoder hidden-1 width

    # ---- vreg-aligned views into the activation slab ----
    x = act_ref[:, 0:LANE]                       # x_cat zero-padded to 128
    eps = act_ref[:, LANE:LANE + L]              # (B, L)
    dm1 = act_ref[:, 2 * LANE:2 * LANE + 32]     # (B, 32)
    dm2 = act_ref[:, 3 * LANE:3 * LANE + 16]     # (B, 16)

    # ---- encoders: T towers packed block-diagonally ----
    h = _bn_relu(_dot(x, ew1_ref[...]),
                 vec_ref[0:1, 0:e1], vec_ref[1:2, 0:e1])         # (B, T*64)
    h = _bn_relu(_dot(h, ew2_ref[...]),
                 vec_ref[2:3, 0:e2], vec_ref[3:4, 0:e2])         # (B, T*32)

    # ---- mu / logvar: one wide matmul; cols 0:128 are the output-slab
    #      contribution, cols 128/256 are lane-0-aligned copies for z ----
    r = _dot(h, mulv_ref[...])                                   # (B, 384)
    mu = r[:, LANE:LANE + L] + vec_ref[14:15, 0:L]
    logvar = r[:, 2 * LANE:2 * LANE + L] + vec_ref[15:16, 0:L]
    z = mu + eps * jnp.exp(0.5 * logvar)

    # ---- integration ----
    zi = _bn_relu(_dot(z, intw_ref[...]),
                  vec_ref[4:5, 0:L], vec_ref[5:6, 0:L])          # (B, L)

    # ---- attr head + classifier L1 + decoder L1 share the z_int operand ----
    t = _dot(zi, zint_ref[...])                                  # (B, 384)

    # classifier (dropout masks fused in)
    c = _bn_relu(t[:, LANE:LANE + 32],
                 vec_ref[6:7, 0:32], vec_ref[7:8, 0:32]) * dm1
    c = _bn_relu(_dot(c, c2w_ref[...]),
                 vec_ref[8:9, 0:16], vec_ref[9:10, 0:16]) * dm2  # (B, 16)

    # decoders
    d = _bn_relu(t[:, 2 * LANE:2 * LANE + e2],
                 vec_ref[10:11, 0:e2], vec_ref[11:12, 0:e2])     # (B, T*32)
    d = _bn_relu(_dot(d, d2w_ref[...]),
                 vec_ref[12:13, 0:e1], vec_ref[13:14, 0:e1])     # (B, T*64)

    # ---- packed output slab: sum of pre-placed head contributions ----
    out_ref[...] = (r[:, 0:LANE] + t[:, 0:LANE]
                    + _dot(c, c3w_ref[...]) + _dot(d, d3w_ref[...])
                    + vec_ref[16:17, 0:LANE])


def _fused_forward(act, packed, *, T, latent_dim):
    B = act.shape[0]
    kernel = functools.partial(_fused_vae_kernel, T=T, latent_dim=latent_dim)
    vmem = pl.BlockSpec(memory_space=pltpu.MemorySpace.VMEM)
    return pl.pallas_call(
        kernel,
        out_shape=jax.ShapeDtypeStruct((B, LANE), jnp.float32),
        in_specs=[vmem] * 11,
        out_specs=vmem,
    )(act, packed['vec'], packed['ew1'], packed['ew2'], packed['mulv'],
      packed['int_w'], packed['zint'], packed['c2w'], packed['c3w'],
      packed['d2w'], packed['d3w'])


# ----------------------------------------------------------------------------
# Deterministic parameter initialization (shapes follow the PyTorch __init__);
# Linear weights stored as (in_features, out_features).
# ----------------------------------------------------------------------------
def _linear_params(key, in_dim, out_dim):
    kw, kb = jax.random.split(key)
    bound = 1.0 / jnp.sqrt(jnp.float32(in_dim))
    w = jax.random.uniform(kw, (in_dim, out_dim), jnp.float32, -bound, bound)
    b = jax.random.uniform(kb, (out_dim,), jnp.float32, -bound, bound)
    return w, b


def _bn_params(out_dim):
    return jnp.ones((out_dim,), jnp.float32), jnp.zeros((out_dim,), jnp.float32)


def init_params(key, input_dims, latent_dim=32, embed_dim=16, n_attrs=3):
    T = len(input_dims)
    keys = iter(jax.random.split(key, 16 + 4 * T))
    p = {}
    p['time_emb'] = jax.random.normal(next(keys), (T, embed_dim), jnp.float32)

    p['encoders'] = []
    for d in input_dims:
        w1, b1 = _linear_params(next(keys), d + embed_dim, 64)
        g1, be1 = _bn_params(64)
        w2, b2 = _linear_params(next(keys), 64, 32)
        g2, be2 = _bn_params(32)
        p['encoders'].append(dict(w1=w1, b1=b1, g1=g1, be1=be1,
                                  w2=w2, b2=b2, g2=g2, be2=be2))

    p['mu_w'], p['mu_b'] = _linear_params(next(keys), 32 * T, latent_dim)
    p['lv_w'], p['lv_b'] = _linear_params(next(keys), 32 * T, latent_dim)

    p['int_w'], p['int_b'] = _linear_params(next(keys), latent_dim, latent_dim)
    p['int_g'], p['int_be'] = _bn_params(latent_dim)

    p['attr_w'], p['attr_b'] = _linear_params(next(keys), latent_dim, n_attrs)

    p['cls_w1'], p['cls_b1'] = _linear_params(next(keys), latent_dim, 32)
    p['cls_g1'], p['cls_be1'] = _bn_params(32)
    p['cls_w2'], p['cls_b2'] = _linear_params(next(keys), 32, 16)
    p['cls_g2'], p['cls_be2'] = _bn_params(16)
    p['cls_w3'], p['cls_b3'] = _linear_params(next(keys), 16, 1)

    p['decoders'] = []
    for d in input_dims:
        w1, b1 = _linear_params(next(keys), latent_dim + embed_dim, 32)
        g1, be1 = _bn_params(32)
        w2, b2 = _linear_params(next(keys), 32, 64)
        g2, be2 = _bn_params(64)
        w3, b3 = _linear_params(next(keys), 64, d)
        p['decoders'].append(dict(w1=w1, b1=b1, g1=g1, be1=be1,
                                  w2=w2, b2=b2, g2=g2, be2=be2,
                                  w3=w3, b3=b3))
    return p


# ----------------------------------------------------------------------------
# One-time weight packing (call OUTSIDE the per-step jit).
# Time-embedding contributions and all Linear->BN biases are dropped: they are
# per-column constants cancelled by training-mode batch-stat BatchNorm.
# ----------------------------------------------------------------------------
def pack_params(params, input_dims, latent_dim=32):
    T = len(input_dims)
    sum_d = sum(input_dims)
    L = latent_dim
    n_attrs = params['attr_w'].shape[1]
    e1, e2 = 64 * T, 32 * T
    f32 = jnp.float32

    assert sum_d <= LANE and e2 <= LANE and L <= LANE
    assert sum_d + 2 * L + n_attrs + 1 <= LANE, "output heads must fit 128 lanes"

    off_mu = sum_d
    off_lv = sum_d + L
    off_attr = sum_d + 2 * L
    off_y = off_attr + n_attrs

    enc = params['encoders']
    dec = params['decoders']

    # encoder layer 1: block-diag of the x-part of w1, K zero-padded to 128.
    ew1 = jnp.zeros((LANE, e1), f32)
    r0 = 0
    for i, d in enumerate(input_dims):
        ew1 = ew1.at[r0:r0 + d, 64 * i:64 * (i + 1)].set(enc[i]['w1'][:d])
        r0 += d
    ew2 = block_diag(*[enc[i]['w2'] for i in range(T)])             # (e1, e2)

    # mu/logvar: output-slab placement in cols 0:128, aligned copies at 128/256
    mulv = jnp.zeros((e2, 3 * LANE), f32)
    mulv = mulv.at[:, off_mu:off_mu + L].set(params['mu_w'])
    mulv = mulv.at[:, off_lv:off_lv + L].set(params['lv_w'])
    mulv = mulv.at[:, LANE:LANE + L].set(params['mu_w'])
    mulv = mulv.at[:, 2 * LANE:2 * LANE + L].set(params['lv_w'])

    int_w = params['int_w']

    # attr head + classifier L1 + decoder L1 share the z_int operand.
    zint = jnp.zeros((L, 3 * LANE), f32)
    if n_attrs:
        zint = zint.at[:, off_attr:off_attr + n_attrs].set(params['attr_w'])
    zint = zint.at[:, LANE:LANE + 32].set(params['cls_w1'])
    d1w = jnp.concatenate([dec[i]['w1'][:L] for i in range(T)], axis=1)  # (L, e2)
    zint = zint.at[:, 2 * LANE:2 * LANE + e2].set(d1w)

    c2w = params['cls_w2']
    c3w = jnp.zeros((16, LANE), f32).at[:, off_y:off_y + 1].set(params['cls_w3'])

    d2w = block_diag(*[dec[i]['w2'] for i in range(T)])             # (e2, e1)
    d3w = jnp.zeros((e1, LANE), f32)
    d3w = d3w.at[:, 0:sum_d].set(block_diag(*[dec[i]['w3'] for i in range(T)]))

    # vector slab: BN gamma/beta rows, mu/logvar biases, packed output bias.
    vw = max(e1, LANE)
    vec = jnp.zeros((17, vw), f32)
    vec = vec.at[0, 0:e1].set(jnp.concatenate([enc[i]['g1'] for i in range(T)]))
    vec = vec.at[1, 0:e1].set(jnp.concatenate([enc[i]['be1'] for i in range(T)]))
    vec = vec.at[2, 0:e2].set(jnp.concatenate([enc[i]['g2'] for i in range(T)]))
    vec = vec.at[3, 0:e2].set(jnp.concatenate([enc[i]['be2'] for i in range(T)]))
    vec = vec.at[4, 0:L].set(params['int_g'])
    vec = vec.at[5, 0:L].set(params['int_be'])
    vec = vec.at[6, 0:32].set(params['cls_g1'])
    vec = vec.at[7, 0:32].set(params['cls_be1'])
    vec = vec.at[8, 0:16].set(params['cls_g2'])
    vec = vec.at[9, 0:16].set(params['cls_be2'])
    vec = vec.at[10, 0:e2].set(jnp.concatenate([dec[i]['g1'] for i in range(T)]))
    vec = vec.at[11, 0:e2].set(jnp.concatenate([dec[i]['be1'] for i in range(T)]))
    vec = vec.at[12, 0:e1].set(jnp.concatenate([dec[i]['g2'] for i in range(T)]))
    vec = vec.at[13, 0:e1].set(jnp.concatenate([dec[i]['be2'] for i in range(T)]))
    vec = vec.at[14, 0:L].set(params['mu_b'])
    vec = vec.at[15, 0:L].set(params['lv_b'])

    out_bias = jnp.zeros((LANE,), f32)
    out_bias = out_bias.at[0:sum_d].set(
        jnp.concatenate([dec[i]['b3'] for i in range(T)]))
    out_bias = out_bias.at[off_mu:off_mu + L].set(params['mu_b'])
    out_bias = out_bias.at[off_lv:off_lv + L].set(params['lv_b'])
    if n_attrs:
        out_bias = out_bias.at[off_attr:off_attr + n_attrs].set(params['attr_b'])
    out_bias = out_bias.at[off_y].set(params['cls_b3'][0])
    vec = vec.at[16, 0:LANE].set(out_bias)

    return dict(vec=vec, ew1=ew1, ew2=ew2, mulv=mulv, int_w=int_w, zint=zint,
                c2w=c2w, c3w=c3w, d2w=d2w, d3w=d3w)


# ----------------------------------------------------------------------------
# Forward (mirrors MIComplicationsVAE.forward); takes the PACKED params.
# ----------------------------------------------------------------------------
def mi_vae_forward(packed, x_list, eps_noise, dropout_masks, *,
                   latent_dim=32, n_attrs=3):
    input_dims = [int(x.shape[1]) for x in x_list]
    T = len(input_dims)
    sum_d = sum(input_dims)

    x_cat = jnp.concatenate([x.astype(jnp.float32) for x in x_list], axis=1)

    def pad_lane(a):
        a = a.astype(jnp.float32)
        return jnp.pad(a, ((0, 0), (0, LANE - a.shape[1])))

    # single activation slab: [x_cat | eps | dm1 | dm2] at 128-lane offsets
    act = jnp.concatenate([pad_lane(x_cat), pad_lane(eps_noise),
                           pad_lane(dropout_masks[0]),
                           pad_lane(dropout_masks[1])], axis=1)     # (B, 512)

    slab = _fused_forward(act, packed, T=T, latent_dim=latent_dim)  # (B, 128)

    recon_cat = slab[:, :sum_d]
    mu = slab[:, sum_d:sum_d + latent_dim]
    logvar = slab[:, sum_d + latent_dim:sum_d + 2 * latent_dim]
    a0 = sum_d + 2 * latent_dim
    attr_pred = slab[:, a0:a0 + n_attrs]
    y_pred = slab[:, a0 + n_attrs:a0 + n_attrs + 1]

    recon_list = []
    o = 0
    for d in input_dims:
        recon_list.append(recon_cat[:, o:o + d])
        o += d

    # MedicalSafetyLayer(x, feature_names=None) -> (x, None): identity.
    safety_loss = None
    return recon_list, mu, logvar, attr_pred, y_pred, safety_loss


# ----------------------------------------------------------------------------
if __name__ == "__main__":
    key = jax.random.PRNGKey(0)
    input_dims = [12, 16, 12]   # 3 timepoints with small feature dims
    batch = 8
    latent_dim, embed_dim, n_attrs = 32, 16, 3

    k_param, k_x, k_eps, k_d0, k_d1 = jax.random.split(key, 5)
    params = init_params(k_param, input_dims, latent_dim, embed_dim, n_attrs)

    # Pack ONCE, outside the per-step jitted path (perf-review item #1).
    packed = pack_params(params, input_dims, latent_dim)

    x_keys = jax.random.split(k_x, len(input_dims))
    x_list = [jax.random.normal(xk, (batch, d), jnp.float32)
              for xk, d in zip(x_keys, input_dims)]

    eps_noise = jax.random.normal(k_eps, (batch, latent_dim), jnp.float32)
    p_drop = 0.2
    dropout_masks = [
        (jax.random.uniform(k_d0, (batch, 32)) >= p_drop).astype(jnp.float32) / (1.0 - p_drop),
        (jax.random.uniform(k_d1, (batch, 16)) >= p_drop).astype(jnp.float32) / (1.0 - p_drop),
    ]

    fwd = jax.jit(functools.partial(mi_vae_forward,
                                    latent_dim=latent_dim, n_attrs=n_attrs))
    recon_list, mu, logvar, attr_pred, y_pred, safety_loss = fwd(
        packed, x_list, eps_noise, dropout_masks)

    jax.block_until_ready((recon_list, mu, logvar, attr_pred, y_pred))

    assert mu.shape == (batch, latent_dim)
    assert logvar.shape == (batch, latent_dim)
    assert attr_pred.shape == (batch, n_attrs)
    assert y_pred.shape == (batch, 1)
    assert [r.shape for r in recon_list] == [(batch, d) for d in input_dims]
    assert safety_loss is None
    assert all(bool(jnp.all(jnp.isfinite(r))) for r in recon_list)
    assert bool(jnp.all(jnp.isfinite(mu))) and bool(jnp.all(jnp.isfinite(logvar)))
    assert bool(jnp.all(jnp.isfinite(attr_pred))) and bool(jnp.all(jnp.isfinite(y_pred)))

    print("KERNEL_OK")
</pallas_src>

<mosaic_0001>
module attributes {stable_mosaic.version = 11 : i64} {
  func.func @_fused_vae_kernel(%arg0: memref<8x512xf32, #tpu.memory_space<vmem>>, %arg1: memref<17x192xf32, #tpu.memory_space<vmem>>, %arg2: memref<128x192xf32, #tpu.memory_space<vmem>>, %arg3: memref<192x96xf32, #tpu.memory_space<vmem>>, %arg4: memref<96x384xf32, #tpu.memory_space<vmem>>, %arg5: memref<32x32xf32, #tpu.memory_space<vmem>>, %arg6: memref<32x384xf32, #tpu.memory_space<vmem>>, %arg7: memref<32x16xf32, #tpu.memory_space<vmem>>, %arg8: memref<16x128xf32, #tpu.memory_space<vmem>>, %arg9: memref<96x192xf32, #tpu.memory_space<vmem>>, %arg10: memref<192x128xf32, #tpu.memory_space<vmem>>, %arg11: memref<8x128xf32, #tpu.memory_space<vmem>>) attributes {dimension_semantics = [], scalar_prefetch = 0 : i64, scratch_operands = 0 : i64, tpu.core_type = #tpu.core_type<tc>} {
    %c0 = arith.constant 0 : index
    %c0_0 = arith.constant 0 : index
    %0 = vector.load %arg0[%c0, %c0_0] : memref<8x512xf32, #tpu.memory_space<vmem>>, vector<8x128xf32>
    %c0_1 = arith.constant 0 : index
    %c128 = arith.constant 128 : index
    %1 = vector.load %arg0[%c0_1, %c128] : memref<8x512xf32, #tpu.memory_space<vmem>>, vector<8x32xf32>
    %c0_2 = arith.constant 0 : index
    %c256 = arith.constant 256 : index
    %2 = vector.load %arg0[%c0_2, %c256] : memref<8x512xf32, #tpu.memory_space<vmem>>, vector<8x32xf32>
    %c0_3 = arith.constant 0 : index
    %c384 = arith.constant 384 : index
    %3 = vector.load %arg0[%c0_3, %c384] : memref<8x512xf32, #tpu.memory_space<vmem>>, vector<8x16xf32>
    %c0_4 = arith.constant 0 : index
    %c0_5 = arith.constant 0 : index
    %4 = vector.load %arg2[%c0_4, %c0_5] : memref<128x192xf32, #tpu.memory_space<vmem>>, vector<128x192xf32>
    %cst = arith.constant dense<0.000000e+00> : vector<8x192xf32>
    %5 = tpu.matmul %0, %4, %cst {dimension_numbers = #tpu.dot_dimension_numbers<[1], [0], [0], [1], [0, 0, 1, 1], [], []>} : vector<8x128xf32>, vector<128x192xf32>, vector<8x192xf32> -> vector<8x192xf32>
    %c0_6 = arith.constant 0 : index
    %c0_7 = arith.constant 0 : index
    %6 = vector.load %arg1[%c0_6, %c0_7] : memref<17x192xf32, #tpu.memory_space<vmem>>, vector<1x192xf32>
    %c1 = arith.constant 1 : index
    %c0_8 = arith.constant 0 : index
    %7 = vector.load %arg1[%c1, %c0_8] : memref<17x192xf32, #tpu.memory_space<vmem>>, vector<1x192xf32>
    %cst_9 = arith.constant dense<0.000000e+00> : vector<192xf32>
    %8 = vector.multi_reduction <add>, %5, %cst_9 [0] : vector<8x192xf32> to vector<192xf32>
    %9 = vector.shape_cast %8 : vector<192xf32> to vector<1x192xf32>
    %cst_10 = arith.constant 8.000000e+00 : f32
    %10 = vector.broadcast %cst_10 : f32 to vector<1x192xf32>
    %11 = arith.divf %9, %10 : vector<1x192xf32>
    %12 = arith.mulf %5, %5 : vector<8x192xf32>
    %cst_11 = arith.constant dense<0.000000e+00> : vector<192xf32>
    %13 = vector.multi_reduction <add>, %12, %cst_11 [0] : vector<8x192xf32> to vector<192xf32>
    %14 = vector.shape_cast %13 : vector<192xf32> to vector<1x192xf32>
    %cst_12 = arith.constant 8.000000e+00 : f32
    %15 = vector.broadcast %cst_12 : f32 to vector<1x192xf32>
    %16 = arith.divf %14, %15 : vector<1x192xf32>
    %17 = arith.mulf %11, %11 : vector<1x192xf32>
    %18 = arith.subf %16, %17 : vector<1x192xf32>
    %cst_13 = arith.constant 9.99999974E-6 : f32
    %19 = vector.broadcast %cst_13 : f32 to vector<1x192xf32>
    %20 = arith.addf %18, %19 : vector<1x192xf32>
    %21 = math.rsqrt %20 : vector<1x192xf32>
    %22 = arith.mulf %6, %21 : vector<1x192xf32>
    %23 = arith.mulf %11, %22 : vector<1x192xf32>
    %24 = arith.subf %7, %23 : vector<1x192xf32>
    %25 = vector.broadcast %22 : vector<1x192xf32> to vector<8x192xf32>
    %26 = arith.mulf %5, %25 : vector<8x192xf32>
    %27 = vector.broadcast %24 : vector<1x192xf32> to vector<8x192xf32>
    %28 = arith.addf %26, %27 : vector<8x192xf32>
    %cst_14 = arith.constant 0.000000e+00 : f32
    %29 = vector.broadcast %cst_14 : f32 to vector<8x192xf32>
    %30 = arith.maximumf %28, %29 : vector<8x192xf32>
    %c0_15 = arith.constant 0 : index
    %c0_16 = arith.constant 0 : index
    %31 = vector.load %arg3[%c0_15, %c0_16] : memref<192x96xf32, #tpu.memory_space<vmem>>, vector<192x96xf32>
    %cst_17 = arith.constant dense<0.000000e+00> : vector<8x96xf32>
    %32 = tpu.matmul %30, %31, %cst_17 {dimension_numbers = #tpu.dot_dimension_numbers<[1], [0], [0], [1], [0, 0, 1, 1], [], []>} : vector<8x192xf32>, vector<192x96xf32>, vector<8x96xf32> -> vector<8x96xf32>
    %c2 = arith.constant 2 : index
    %c0_18 = arith.constant 0 : index
    %33 = vector.load %arg1[%c2, %c0_18] : memref<17x192xf32, #tpu.memory_space<vmem>>, vector<1x96xf32>
    %c3 = arith.constant 3 : index
    %c0_19 = arith.constant 0 : index
    %34 = vector.load %arg1[%c3, %c0_19] : memref<17x192xf32, #tpu.memory_space<vmem>>, vector<1x96xf32>
    %cst_20 = arith.constant dense<0.000000e+00> : vector<96xf32>
    %35 = vector.multi_reduction <add>, %32, %cst_20 [0] : vector<8x96xf32> to vector<96xf32>
    %36 = vector.shape_cast %35 : vector<96xf32> to vector<1x96xf32>
    %cst_21 = arith.constant 8.000000e+00 : f32
    %37 = vector.broadcast %cst_21 : f32 to vector<1x96xf32>
    %38 = arith.divf %36, %37 : vector<1x96xf32>
    %39 = arith.mulf %32, %32 : vector<8x96xf32>
    %cst_22 = arith.constant dense<0.000000e+00> : vector<96xf32>
    %40 = vector.multi_reduction <add>, %39, %cst_22 [0] : vector<8x96xf32> to vector<96xf32>
    %41 = vector.shape_cast %40 : vector<96xf32> to vector<1x96xf32>
    %cst_23 = arith.constant 8.000000e+00 : f32
    %42 = vector.broadcast %cst_23 : f32 to vector<1x96xf32>
    %43 = arith.divf %41, %42 : vector<1x96xf32>
    %44 = arith.mulf %38, %38 : vector<1x96xf32>
    %45 = arith.subf %43, %44 : vector<1x96xf32>
    %cst_24 = arith.constant 9.99999974E-6 : f32
    %46 = vector.broadcast %cst_24 : f32 to vector<1x96xf32>
    %47 = arith.addf %45, %46 : vector<1x96xf32>
    %48 = math.rsqrt %47 : vector<1x96xf32>
    %49 = arith.mulf %33, %48 : vector<1x96xf32>
    %50 = arith.mulf %38, %49 : vector<1x96xf32>
    %51 = arith.subf %34, %50 : vector<1x96xf32>
    %52 = vector.broadcast %49 : vector<1x96xf32> to vector<8x96xf32>
    %53 = arith.mulf %32, %52 : vector<8x96xf32>
    %54 = vector.broadcast %51 : vector<1x96xf32> to vector<8x96xf32>
    %55 = arith.addf %53, %54 : vector<8x96xf32>
    %cst_25 = arith.constant 0.000000e+00 : f32
    %56 = vector.broadcast %cst_25 : f32 to vector<8x96xf32>
    %57 = arith.maximumf %55, %56 : vector<8x96xf32>
    %c0_26 = arith.constant 0 : index
    %c0_27 = arith.constant 0 : index
    %58 = vector.load %arg4[%c0_26, %c0_27] : memref<96x384xf32, #tpu.memory_space<vmem>>, vector<96x384xf32>
    %cst_28 = arith.constant dense<0.000000e+00> : vector<8x384xf32>
    %59 = tpu.matmul %57, %58, %cst_28 {dimension_numbers = #tpu.dot_dimension_numbers<[1], [0], [0], [1], [0, 0, 1, 1], [], []>} : vector<8x96xf32>, vector<96x384xf32>, vector<8x384xf32> -> vector<8x384xf32>
    %60 = vector.extract_strided_slice %59 {offsets = [0, 128], sizes = [8, 32], strides = [1, 1]} : vector<8x384xf32> to vector<8x32xf32>
    %c14 = arith.constant 14 : index
    %c0_29 = arith.constant 0 : index
    %61 = vector.load %arg1[%c14, %c0_29] : memref<17x192xf32, #tpu.memory_space<vmem>>, vector<1x32xf32>
    %62 = vector.broadcast %61 : vector<1x32xf32> to vector<8x32xf32>
    %63 = arith.addf %60, %62 : vector<8x32xf32>
    %64 = vector.extract_strided_slice %59 {offsets = [0, 256], sizes = [8, 32], strides = [1, 1]} : vector<8x384xf32> to vector<8x32xf32>
    %c15 = arith.constant 15 : index
    %c0_30 = arith.constant 0 : index
    %65 = vector.load %arg1[%c15, %c0_30] : memref<17x192xf32, #tpu.memory_space<vmem>>, vector<1x32xf32>
    %66 = vector.broadcast %65 : vector<1x32xf32> to vector<8x32xf32>
    %67 = arith.addf %64, %66 : vector<8x32xf32>
    %cst_31 = arith.constant 5.000000e-01 : f32
    %68 = vector.broadcast %cst_31 : f32 to vector<8x32xf32>
    %69 = arith.mulf %68, %67 : vector<8x32xf32>
    %70 = math.exp %69 : vector<8x32xf32>
    %71 = arith.mulf %1, %70 : vector<8x32xf32>
    %72 = arith.addf %63, %71 : vector<8x32xf32>
    %c0_32 = arith.constant 0 : index
    %c0_33 = arith.constant 0 : index
    %73 = vector.load %arg5[%c0_32, %c0_33] : memref<32x32xf32, #tpu.memory_space<vmem>>, vector<32x32xf32>
    %cst_34 = arith.constant dense<0.000000e+00> : vector<8x32xf32>
    %74 = tpu.matmul %72, %73, %cst_34 {dimension_numbers = #tpu.dot_dimension_numbers<[1], [0], [0], [1], [0, 0, 1, 1], [], []>} : vector<8x32xf32>, vector<32x32xf32>, vector<8x32xf32> -> vector<8x32xf32>
    %c4 = arith.constant 4 : index
    %c0_35 = arith.constant 0 : index
    %75 = vector.load %arg1[%c4, %c0_35] : memref<17x192xf32, #tpu.memory_space<vmem>>, vector<1x32xf32>
    %c5 = arith.constant 5 : index
    %c0_36 = arith.constant 0 : index
    %76 = vector.load %arg1[%c5, %c0_36] : memref<17x192xf32, #tpu.memory_space<vmem>>, vector<1x32xf32>
    %cst_37 = arith.constant dense<0.000000e+00> : vector<32xf32>
    %77 = vector.multi_reduction <add>, %74, %cst_37 [0] : vector<8x32xf32> to vector<32xf32>
    %78 = vector.shape_cast %77 : vector<32xf32> to vector<1x32xf32>
    %cst_38 = arith.constant 8.000000e+00 : f32
    %79 = vector.broadcast %cst_38 : f32 to vector<1x32xf32>
    %80 = arith.divf %78, %79 : vector<1x32xf32>
    %81 = arith.mulf %74, %74 : vector<8x32xf32>
    %cst_39 = arith.constant dense<0.000000e+00> : vector<32xf32>
    %82 = vector.multi_reduction <add>, %81, %cst_39 [0] : vector<8x32xf32> to vector<32xf32>
    %83 = vector.shape_cast %82 : vector<32xf32> to vector<1x32xf32>
    %cst_40 = arith.constant 8.000000e+00 : f32
    %84 = vector.broadcast %cst_40 : f32 to vector<1x32xf32>
    %85 = arith.divf %83, %84 : vector<1x32xf32>
    %86 = arith.mulf %80, %80 : vector<1x32xf32>
    %87 = arith.subf %85, %86 : vector<1x32xf32>
    %cst_41 = arith.constant 9.99999974E-6 : f32
    %88 = vector.broadcast %cst_41 : f32 to vector<1x32xf32>
    %89 = arith.addf %87, %88 : vector<1x32xf32>
    %90 = math.rsqrt %89 : vector<1x32xf32>
    %91 = arith.mulf %75, %90 : vector<1x32xf32>
    %92 = arith.mulf %80, %91 : vector<1x32xf32>
    %93 = arith.subf %76, %92 : vector<1x32xf32>
    %94 = vector.broadcast %91 : vector<1x32xf32> to vector<8x32xf32>
    %95 = arith.mulf %74, %94 : vector<8x32xf32>
    %96 = vector.broadcast %93 : vector<1x32xf32> to vector<8x32xf32>
    %97 = arith.addf %95, %96 : vector<8x32xf32>
    %cst_42 = arith.constant 0.000000e+00 : f32
    %98 = vector.broadcast %cst_42 : f32 to vector<8x32xf32>
    %99 = arith.maximumf %97, %98 : vector<8x32xf32>
    %c0_43 = arith.constant 0 : index
    %c0_44 = arith.constant 0 : index
    %100 = vector.load %arg6[%c0_43, %c0_44] : memref<32x384xf32, #tpu.memory_space<vmem>>, vector<32x384xf32>
    %cst_45 = arith.constant dense<0.000000e+00> : vector<8x384xf32>
    %101 = tpu.matmul %99, %100, %cst_45 {dimension_numbers = #tpu.dot_dimension_numbers<[1], [0], [0], [1], [0, 0, 1, 1], [], []>} : vector<8x32xf32>, vector<32x384xf32>, vector<8x384xf32> -> vector<8x384xf32>
    %102 = vector.extract_strided_slice %101 {offsets = [0, 128], sizes = [8, 32], strides = [1, 1]} : vector<8x384xf32> to vector<8x32xf32>
    %c6 = arith.constant 6 : index
    %c0_46 = arith.constant 0 : index
    %103 = vector.load %arg1[%c6, %c0_46] : memref<17x192xf32, #tpu.memory_space<vmem>>, vector<1x32xf32>
    %c7 = arith.constant 7 : index
    %c0_47 = arith.constant 0 : index
    %104 = vector.load %arg1[%c7, %c0_47] : memref<17x192xf32, #tpu.memory_space<vmem>>, vector<1x32xf32>
    %cst_48 = arith.constant dense<0.000000e+00> : vector<32xf32>
    %105 = vector.multi_reduction <add>, %102, %cst_48 [0] : vector<8x32xf32> to vector<32xf32>
    %106 = vector.shape_cast %105 : vector<32xf32> to vector<1x32xf32>
    %cst_49 = arith.constant 8.000000e+00 : f32
    %107 = vector.broadcast %cst_49 : f32 to vector<1x32xf32>
    %108 = arith.divf %106, %107 : vector<1x32xf32>
    %109 = arith.mulf %102, %102 : vector<8x32xf32>
    %cst_50 = arith.constant dense<0.000000e+00> : vector<32xf32>
    %110 = vector.multi_reduction <add>, %109, %cst_50 [0] : vector<8x32xf32> to vector<32xf32>
    %111 = vector.shape_cast %110 : vector<32xf32> to vector<1x32xf32>
    %cst_51 = arith.constant 8.000000e+00 : f32
    %112 = vector.broadcast %cst_51 : f32 to vector<1x32xf32>
    %113 = arith.divf %111, %112 : vector<1x32xf32>
    %114 = arith.mulf %108, %108 : vector<1x32xf32>
    %115 = arith.subf %113, %114 : vector<1x32xf32>
    %cst_52 = arith.constant 9.99999974E-6 : f32
    %116 = vector.broadcast %cst_52 : f32 to vector<1x32xf32>
    %117 = arith.addf %115, %116 : vector<1x32xf32>
    %118 = math.rsqrt %117 : vector<1x32xf32>
    %119 = arith.mulf %103, %118 : vector<1x32xf32>
    %120 = arith.mulf %108, %119 : vector<1x32xf32>
    %121 = arith.subf %104, %120 : vector<1x32xf32>
    %122 = vector.broadcast %119 : vector<1x32xf32> to vector<8x32xf32>
    %123 = arith.mulf %102, %122 : vector<8x32xf32>
    %124 = vector.broadcast %121 : vector<1x32xf32> to vector<8x32xf32>
    %125 = arith.addf %123, %124 : vector<8x32xf32>
    %cst_53 = arith.constant 0.000000e+00 : f32
    %126 = vector.broadcast %cst_53 : f32 to vector<8x32xf32>
    %127 = arith.maximumf %125, %126 : vector<8x32xf32>
    %128 = arith.mulf %127, %2 : vector<8x32xf32>
    %c0_54 = arith.constant 0 : index
    %c0_55 = arith.constant 0 : index
    %129 = vector.load %arg7[%c0_54, %c0_55] : memref<32x16xf32, #tpu.memory_space<vmem>>, vector<32x16xf32>
    %cst_56 = arith.constant dense<0.000000e+00> : vector<8x16xf32>
    %130 = tpu.matmul %128, %129, %cst_56 {dimension_numbers = #tpu.dot_dimension_numbers<[1], [0], [0], [1], [0, 0, 1, 1], [], []>} : vector<8x32xf32>, vector<32x16xf32>, vector<8x16xf32> -> vector<8x16xf32>
    %c8 = arith.constant 8 : index
    %c0_57 = arith.constant 0 : index
    %131 = vector.load %arg1[%c8, %c0_57] : memref<17x192xf32, #tpu.memory_space<vmem>>, vector<1x16xf32>
    %c9 = arith.constant 9 : index
    %c0_58 = arith.constant 0 : index
    %132 = vector.load %arg1[%c9, %c0_58] : memref<17x192xf32, #tpu.memory_space<vmem>>, vector<1x16xf32>
    %cst_59 = arith.constant dense<0.000000e+00> : vector<16xf32>
    %133 = vector.multi_reduction <add>, %130, %cst_59 [0] : vector<8x16xf32> to vector<16xf32>
    %134 = vector.shape_cast %133 : vector<16xf32> to vector<1x16xf32>
    %cst_60 = arith.constant 8.000000e+00 : f32
    %135 = vector.broadcast %cst_60 : f32 to vector<1x16xf32>
    %136 = arith.divf %134, %135 : vector<1x16xf32>
    %137 = arith.mulf %130, %130 : vector<8x16xf32>
    %cst_61 = arith.constant dense<0.000000e+00> : vector<16xf32>
    %138 = vector.multi_reduction <add>, %137, %cst_61 [0] : vector<8x16xf32> to vector<16xf32>
    %139 = vector.shape_cast %138 : vector<16xf32> to vector<1x16xf32>
    %cst_62 = arith.constant 8.000000e+00 : f32
    %140 = vector.broadcast %cst_62 : f32 to vector<1x16xf32>
    %141 = arith.divf %139, %140 : vector<1x16xf32>
    %142 = arith.mulf %136, %136 : vector<1x16xf32>
    %143 = arith.subf %141, %142 : vector<1x16xf32>
    %cst_63 = arith.constant 9.99999974E-6 : f32
    %144 = vector.broadcast %cst_63 : f32 to vector<1x16xf32>
    %145 = arith.addf %143, %144 : vector<1x16xf32>
    %146 = math.rsqrt %145 : vector<1x16xf32>
    %147 = arith.mulf %131, %146 : vector<1x16xf32>
    %148 = arith.mulf %136, %147 : vector<1x16xf32>
    %149 = arith.subf %132, %148 : vector<1x16xf32>
    %150 = vector.broadcast %147 : vector<1x16xf32> to vector<8x16xf32>
    %151 = arith.mulf %130, %150 : vector<8x16xf32>
    %152 = vector.broadcast %149 : vector<1x16xf32> to vector<8x16xf32>
    %153 = arith.addf %151, %152 : vector<8x16xf32>
    %cst_64 = arith.constant 0.000000e+00 : f32
    %154 = vector.broadcast %cst_64 : f32 to vector<8x16xf32>
    %155 = arith.maximumf %153, %154 : vector<8x16xf32>
    %156 = arith.mulf %155, %3 : vector<8x16xf32>
    %157 = vector.extract_strided_slice %101 {offsets = [0, 256], sizes = [8, 96], strides = [1, 1]} : vector<8x384xf32> to vector<8x96xf32>
    %c10 = arith.constant 10 : index
    %c0_65 = arith.constant 0 : index
    %158 = vector.load %arg1[%c10, %c0_65] : memref<17x192xf32, #tpu.memory_space<vmem>>, vector<1x96xf32>
    %c11 = arith.constant 11 : index
    %c0_66 = arith.constant 0 : index
    %159 = vector.load %arg1[%c11, %c0_66] : memref<17x192xf32, #tpu.memory_space<vmem>>, vector<1x96xf32>
    %cst_67 = arith.constant dense<0.000000e+00> : vector<96xf32>
    %160 = vector.multi_reduction <add>, %157, %cst_67 [0] : vector<8x96xf32> to vector<96xf32>
    %161 = vector.shape_cast %160 : vector<96xf32> to vector<1x96xf32>
    %cst_68 = arith.constant 8.000000e+00 : f32
    %162 = vector.broadcast %cst_68 : f32 to vector<1x96xf32>
    %163 = arith.divf %161, %162 : vector<1x96xf32>
    %164 = arith.mulf %157, %157 : vector<8x96xf32>
    %cst_69 = arith.constant dense<0.000000e+00> : vector<96xf32>
    %165 = vector.multi_reduction <add>, %164, %cst_69 [0] : vector<8x96xf32> to vector<96xf32>
    %166 = vector.shape_cast %165 : vector<96xf32> to vector<1x96xf32>
    %cst_70 = arith.constant 8.000000e+00 : f32
    %167 = vector.broadcast %cst_70 : f32 to vector<1x96xf32>
    %168 = arith.divf %166, %167 : vector<1x96xf32>
    %169 = arith.mulf %163, %163 : vector<1x96xf32>
    %170 = arith.subf %168, %169 : vector<1x96xf32>
    %cst_71 = arith.constant 9.99999974E-6 : f32
    %171 = vector.broadcast %cst_71 : f32 to vector<1x96xf32>
    %172 = arith.addf %170, %171 : vector<1x96xf32>
    %173 = math.rsqrt %172 : vector<1x96xf32>
    %174 = arith.mulf %158, %173 : vector<1x96xf32>
    %175 = arith.mulf %163, %174 : vector<1x96xf32>
    %176 = arith.subf %159, %175 : vector<1x96xf32>
    %177 = vector.broadcast %174 : vector<1x96xf32> to vector<8x96xf32>
    %178 = arith.mulf %157, %177 : vector<8x96xf32>
    %179 = vector.broadcast %176 : vector<1x96xf32> to vector<8x96xf32>
    %180 = arith.addf %178, %179 : vector<8x96xf32>
    %cst_72 = arith.constant 0.000000e+00 : f32
    %181 = vector.broadcast %cst_72 : f32 to vector<8x96xf32>
    %182 = arith.maximumf %180, %181 : vector<8x96xf32>
    %c0_73 = arith.constant 0 : index
    %c0_74 = arith.constant 0 : index
    %183 = vector.load %arg9[%c0_73, %c0_74] : memref<96x192xf32, #tpu.memory_space<vmem>>, vector<96x192xf32>
    %cst_75 = arith.constant dense<0.000000e+00> : vector<8x192xf32>
    %184 = tpu.matmul %182, %183, %cst_75 {dimension_numbers = #tpu.dot_dimension_numbers<[1], [0], [0], [1], [0, 0, 1, 1], [], []>} : vector<8x96xf32>, vector<96x192xf32>, vector<8x192xf32> -> vector<8x192xf32>
    %c12 = arith.constant 12 : index
    %c0_76 = arith.constant 0 : index
    %185 = vector.load %arg1[%c12, %c0_76] : memref<17x192xf32, #tpu.memory_space<vmem>>, vector<1x192xf32>
    %c13 = arith.constant 13 : index
    %c0_77 = arith.constant 0 : index
    %186 = vector.load %arg1[%c13, %c0_77] : memref<17x192xf32, #tpu.memory_space<vmem>>, vector<1x192xf32>
    %cst_78 = arith.constant dense<0.000000e+00> : vector<192xf32>
    %187 = vector.multi_reduction <add>, %184, %cst_78 [0] : vector<8x192xf32> to vector<192xf32>
    %188 = vector.shape_cast %187 : vector<192xf32> to vector<1x192xf32>
    %cst_79 = arith.constant 8.000000e+00 : f32
    %189 = vector.broadcast %cst_79 : f32 to vector<1x192xf32>
    %190 = arith.divf %188, %189 : vector<1x192xf32>
    %191 = arith.mulf %184, %184 : vector<8x192xf32>
    %cst_80 = arith.constant dense<0.000000e+00> : vector<192xf32>
    %192 = vector.multi_reduction <add>, %191, %cst_80 [0] : vector<8x192xf32> to vector<192xf32>
    %193 = vector.shape_cast %192 : vector<192xf32> to vector<1x192xf32>
    %cst_81 = arith.constant 8.000000e+00 : f32
    %194 = vector.broadcast %cst_81 : f32 to vector<1x192xf32>
    %195 = arith.divf %193, %194 : vector<1x192xf32>
    %196 = arith.mulf %190, %190 : vector<1x192xf32>
    %197 = arith.subf %195, %196 : vector<1x192xf32>
    %cst_82 = arith.constant 9.99999974E-6 : f32
    %198 = vector.broadcast %cst_82 : f32 to vector<1x192xf32>
    %199 = arith.addf %197, %198 : vector<1x192xf32>
    %200 = math.rsqrt %199 : vector<1x192xf32>
    %201 = arith.mulf %185, %200 : vector<1x192xf32>
    %202 = arith.mulf %190, %201 : vector<1x192xf32>
    %203 = arith.subf %186, %202 : vector<1x192xf32>
    %204 = vector.broadcast %201 : vector<1x192xf32> to vector<8x192xf32>
    %205 = arith.mulf %184, %204 : vector<8x192xf32>
    %206 = vector.broadcast %203 : vector<1x192xf32> to vector<8x192xf32>
    %207 = arith.addf %205, %206 : vector<8x192xf32>
    %cst_83 = arith.constant 0.000000e+00 : f32
    %208 = vector.broadcast %cst_83 : f32 to vector<8x192xf32>
    %209 = arith.maximumf %207, %208 : vector<8x192xf32>
    %210 = vector.extract_strided_slice %59 {offsets = [0, 0], sizes = [8, 128], strides = [1, 1]} : vector<8x384xf32> to vector<8x128xf32>
    %211 = vector.extract_strided_slice %101 {offsets = [0, 0], sizes = [8, 128], strides = [1, 1]} : vector<8x384xf32> to vector<8x128xf32>
    %212 = arith.addf %210, %211 : vector<8x128xf32>
    %c0_84 = arith.constant 0 : index
    %c0_85 = arith.constant 0 : index
    %213 = vector.load %arg8[%c0_84, %c0_85] : memref<16x128xf32, #tpu.memory_space<vmem>>, vector<16x128xf32>
    %cst_86 = arith.constant dense<0.000000e+00> : vector<8x128xf32>
    %214 = tpu.matmul %156, %213, %cst_86 {dimension_numbers = #tpu.dot_dimension_numbers<[1], [0], [0], [1], [0, 0, 1, 1], [], []>} : vector<8x16xf32>, vector<16x128xf32>, vector<8x128xf32> -> vector<8x128xf32>
    %215 = arith.addf %212, %214 : vector<8x128xf32>
    %c0_87 = arith.constant 0 : index
    %c0_88 = arith.constant 0 : index
    %216 = vector.load %arg10[%c0_87, %c0_88] : memref<192x128xf32, #tpu.memory_space<vmem>>, vector<192x128xf32>
    %cst_89 = arith.constant dense<0.000000e+00> : vector<8x128xf32>
    %217 = tpu.matmul %209, %216, %cst_89 {dimension_numbers = #tpu.dot_dimension_numbers<[1], [0], [0], [1], [0, 0, 1, 1], [], []>} : vector<8x192xf32>, vector<192x128xf32>, vector<8x128xf32> -> vector<8x128xf32>
    %218 = arith.addf %215, %217 : vector<8x128xf32>
    %c16 = arith.constant 16 : index
    %c0_90 = arith.constant 0 : index
    %219 = vector.load %arg1[%c16, %c0_90] : memref<17x192xf32, #tpu.memory_space<vmem>>, vector<1x128xf32>
    %220 = vector.broadcast %219 : vector<1x128xf32> to vector<8x128xf32>
    %221 = arith.addf %218, %220 : vector<8x128xf32>
    %c0_91 = arith.constant 0 : index
    %c0_92 = arith.constant 0 : index
    %222 = vector.load %arg11[%c0_91, %c0_92] : memref<8x128xf32, #tpu.memory_space<vmem>>, vector<8x128xf32>
    tpu.vector_store %arg11[%c0_91, %c0_92], %221 {strides = array<i32>} : memref<8x128xf32, #tpu.memory_space<vmem>>, vector<8x128xf32>,
    return
  }
}

</mosaic_0001>

<llo_original>
// kernel: mi_vae_forward.1
$region0: #{mi_vae_forward.1}
  #allocation0 [shape = 'u32[]', space=smem, size = 0x4, offset = 0x4, fixed_abs, tag = 'smem constant byte address 0x4 - core index']
  #allocation1 [shape = 'u32[144,128]{1,0:T(1,128)}', space=vmem, size = 0x12000, scoped, tag = 'internal scratch']
  %s0 = inlined_call_operand.vmem [shape: f32[8,512], index: 0, kind: input, shape index: {}]
  %s1 = inlined_call_operand.hbm [shape: f32[17,192], index: 1, kind: input, shape index: {}]
  %s2 = inlined_call_operand.vmem [shape: f32[128,192], index: 2, kind: input, shape index: {}]
  %s3 = inlined_call_operand.vmem [shape: f32[192,96], index: 3, kind: input, shape index: {}]
  %s4 = inlined_call_operand.vmem [shape: f32[96,384], index: 4, kind: input, shape index: {}]
  %s5 = inlined_call_operand.vmem [shape: f32[32,32], index: 5, kind: input, shape index: {}]
  %s6 = inlined_call_operand.vmem [shape: f32[32,384], index: 6, kind: input, shape index: {}]
  %s7 = inlined_call_operand.vmem [shape: f32[32,16], index: 7, kind: input, shape index: {}]
  %s8 = inlined_call_operand.hbm [shape: f32[16,128], index: 8, kind: input, shape index: {}]
  %s9 = inlined_call_operand.hbm [shape: f32[96,192], index: 9, kind: input, shape index: {}]
  %s10 = inlined_call_operand.hbm [shape: f32[192,128], index: 10, kind: input, shape index: {}]
  %s11 = inlined_call_operand.vmem [shape: f32[8,128], index: 11, kind: output, shape index: {}]
  %s12 = sld [smem:[#allocation0]]
  $region70: #{mi_vae_forward.1} parent=0
    _
  %s14 = ssub.s32 1, %s12
  %s15 = scalar_select 0, %s14, %s12
  $region1: #{mi_vae_forward.1} parent=0
    #allocation2 [shape = 'u8[24576]{0}', space=vmem, size = 0x6000, scoped, tag = 'input window, operand 1, single buffered']
    #allocation3 [shape = 's32[1]{0}', space=sflag, size = 0x4, scoped, tag = 'scoped memory for mi_vae_forward.1']
    #allocation4 [shape = 'u8[8192]{0}', space=vmem, size = 0x2000, scoped, tag = 'input window, operand 8, single buffered']
    #allocation5 [shape = 's32[1]{0}', space=sflag, size = 0x4, scoped, tag = 'scoped memory for mi_vae_forward.1']
    #allocation6 [shape = 'u8[98304]{0}', space=vmem, size = 0x18000, scoped, tag = 'input window, operand 9, single buffered']
    #allocation7 [shape = 'u8[98304]{0}', space=vmem, size = 0x18000, scoped, tag = 'input window, operand 10, single buffered']
    #allocation8 [shape = 's32[1]{0}', space=sflag, size = 0x4, scoped, tag = 'scoped memory for mi_vae_forward.1']
    %16 = vsyncpa [#allocation3], 0
    %17 = vsyncpa [#allocation5], 0
    %18 = vsyncpa [#allocation8], 0
    // Predicated region
    $region2: #{mi_vae_forward.1} parent=1 // pred_check
      _
    $region3: #{mi_vae_forward.1} parent=1 // pred_check_branch
      %20 = sbr.rel (0) target = $region5
    $region4: #{mi_vae_forward.1} parent=1 // pred_region
      _
    $region5: #{mi_vae_forward.1} parent=1 // pred_fallthru
      _
    // Predicated region
    $region6: #{mi_vae_forward.1} parent=1 // pred_check
      _
    $region7: #{mi_vae_forward.1} parent=1 // pred_check_branch
      %22 = sbr.rel (0) target = $region9
    $region8: #{mi_vae_forward.1} parent=1 // pred_region
      %s24 = ssub.s32 768, 768
      %25 = vsyncadd [#allocation3], %s24
      %s26 = sshll.u32 [#allocation2], 4
      %s27 = int_to_ptr.vmem [resolvable:$true] %s26
      %32 = dma.hbm_to_vmem [thread:$0]  %s1, 768, %s27, [#allocation3], 256, 256, 16
    $region9: #{mi_vae_forward.1} parent=1 // pred_fallthru
      _
    // Predicated region
    $region10: #{mi_vae_forward.1} parent=1 // pred_check
      _
    $region11: #{mi_vae_forward.1} parent=1 // pred_check_branch
      %34 = sbr.rel (0) target = $region13
    $region12: #{mi_vae_forward.1} parent=1 // pred_region
      _
    $region13: #{mi_vae_forward.1} parent=1 // pred_fallthru
      _
    // Predicated region
    $region14: #{mi_vae_forward.1} parent=1 // pred_check
      _
    $region15: #{mi_vae_forward.1} parent=1 // pred_check_branch
      %36 = sbr.rel (0) target = $region17
    $region16: #{mi_vae_forward.1} parent=1 // pred_region
      _
    $region17: #{mi_vae_forward.1} parent=1 // pred_fallthru
      _
    // Predicated region
    $region18: #{mi_vae_forward.1} parent=1 // pred_check
      _
    $region19: #{mi_vae_forward.1} parent=1 // pred_check_branch
      %38 = sbr.rel (0) target = $region21
    $region20: #{mi_vae_forward.1} parent=1 // pred_region
      _
    $region21: #{mi_vae_forward.1} parent=1 // pred_fallthru
      _
    // Predicated region
    $region22: #{mi_vae_forward.1} parent=1 // pred_check
      _
    $region23: #{mi_vae_forward.1} parent=1 // pred_check_branch
      %40 = sbr.rel (0) target = $region25
    $region24: #{mi_vae_forward.1} parent=1 // pred_region
      _
    $region25: #{mi_vae_forward.1} parent=1 // pred_fallthru
      _
    // Predicated region
    $region26: #{mi_vae_forward.1} parent=1 // pred_check
      _
    $region27: #{mi_vae_forward.1} parent=1 // pred_check_branch
      %42 = sbr.rel (0) target = $region29
    $region28: #{mi_vae_forward.1} parent=1 // pred_region
      _
    $region29: #{mi_vae_forward.1} parent=1 // pred_fallthru
      _
    // Predicated region
    $region30: #{mi_vae_forward.1} parent=1 // pred_check
      _
    $region31: #{mi_vae_forward.1} parent=1 // pred_check_branch
      %44 = sbr.rel (0) target = $region33
    $region32: #{mi_vae_forward.1} parent=1 // pred_region
      _
    $region33: #{mi_vae_forward.1} parent=1 // pred_fallthru
      _
    // Predicated region
    $region34: #{mi_vae_forward.1} parent=1 // pred_check
      _
    $region35: #{mi_vae_forward.1} parent=1 // pred_check_branch
      %46 = sbr.rel (0) target = $region37
    $region36: #{mi_vae_forward.1} parent=1 // pred_region
      %s48 = ssub.s32 256, 256
      %49 = vsyncadd [#allocation5], %s48
      %s50 = sshll.u32 [#allocation4], 4
      %s51 = int_to_ptr.vmem [resolvable:$true] %s50
      %56 = dma.hbm_to_vmem [thread:$0]  %s8, 256, %s51, [#allocation5], 128, 128, 8
    $region37: #{mi_vae_forward.1} parent=1 // pred_fallthru
      _
    // Predicated region
    $region38: #{mi_vae_forward.1} parent=1 // pred_check
      _
    $region39: #{mi_vae_forward.1} parent=1 // pred_check_branch
      %58 = sbr.rel (0) target = $region41
    $region40: #{mi_vae_forward.1} parent=1 // pred_region
      %s60 = ssub.s32 3072, 3072
      %61 = vsyncadd [#allocation5], %s60
      %s62 = sshll.u32 [#allocation6], 4
      %s63 = int_to_ptr.vmem [resolvable:$true] %s62
      %68 = dma.hbm_to_vmem [thread:$0]  %s9, 3072, %s63, [#allocation5], 256, 256, 16
    $region41: #{mi_vae_forward.1} parent=1 // pred_fallthru
      _
    // Predicated region
    $region42: #{mi_vae_forward.1} parent=1 // pred_check
      _
    $region43: #{mi_vae_forward.1} parent=1 // pred_check_branch
      %70 = sbr.rel (0) target = $region45
    $region44: #{mi_vae_forward.1} parent=1 // pred_region
      %s72 = ssub.s32 3072, 3072
      %73 = vsyncadd [#allocation8], %s72
      %s74 = sshll.u32 [#allocation7], 4
      %s75 = int_to_ptr.vmem [resolvable:$true] %s74
      %80 = dma.hbm_to_vmem [thread:$0]  %s10, 3072, %s75, [#allocation8], 128, 128, 8
    $region45: #{mi_vae_forward.1} parent=1 // pred_fallthru
      _
    // Predicated region
    $region46: #{mi_vae_forward.1} parent=1 // pred_check
      _
    $region47: #{mi_vae_forward.1} parent=1 // pred_check_branch
      %82 = sbr.rel (0) target = $region49
    $region48: #{mi_vae_forward.1} parent=1 // pred_region
      %83 = dma.done [#allocation3], 768
    $region49: #{mi_vae_forward.1} parent=1 // pred_fallthru
      _
    // Predicated region
    $region50: #{mi_vae_forward.1} parent=1 // pred_check
      _
    $region51: #{mi_vae_forward.1} parent=1 // pred_check_branch
      %85 = sbr.rel (0) target = $region53
    $region52: #{mi_vae_forward.1} parent=1 // pred_region
      %86 = dma.done [#allocation5], 256
    $region53: #{mi_vae_forward.1} parent=1 // pred_fallthru
      _
    // Predicated region
    $region54: #{mi_vae_forward.1} parent=1 // pred_check
      _
    $region55: #{mi_vae_forward.1} parent=1 // pred_check_branch
      %88 = sbr.rel (0) target = $region57
    $region56: #{mi_vae_forward.1} parent=1 // pred_region
      %89 = dma.done [#allocation5], 3072
    $region57: #{mi_vae_forward.1} parent=1 // pred_fallthru
      _
    // Predicated region
    $region58: #{mi_vae_forward.1} parent=1 // pred_check
      _
    $region59: #{mi_vae_forward.1} parent=1 // pred_check_branch
      %91 = sbr.rel (0) target = $region61
    $region60: #{mi_vae_forward.1} parent=1 // pred_region
      %92 = dma.done [#allocation8], 3072
    $region61: #{mi_vae_forward.1} parent=1 // pred_fallthru
      _
    %v93 = vld [vmem:[%s0] sm:$0xff]
    %v94 = vld [vmem:[%s0 + $0x8] sm:$0xff]
    %v95 = vld [vmem:[%s0 + $0x10] sm:$0xff]
    %v96 = vld [vmem:[%s0 + $0x18] sm:$0xff]
    %v97 = vld [vmem:[%s2] sm:$0xff]
    %v98 = vld [vmem:[%s2 + $0x8] sm:$0xff]
    %v99 = vld [vmem:[%s2 + $0x10] sm:$0xff]
    %v100 = vld [vmem:[%s2 + $0x18] sm:$0xff]
    %v101 = vld [vmem:[%s2 + $0x20] sm:$0xff]
    %v102 = vld [vmem:[%s2 + $0x28] sm:$0xff]
    %v103 = vld [vmem:[%s2 + $0x30] sm:$0xff]
    %v104 = vld [vmem:[%s2 + $0x38] sm:$0xff]
    %v105 = vld [vmem:[%s2 + $0x40] sm:$0xff]
    %v106 = vld [vmem:[%s2 + $0x48] sm:$0xff]
    %v107 = vld [vmem:[%s2 + $0x50] sm:$0xff]
    %v108 = vld [vmem:[%s2 + $0x58] sm:$0xff]
    %v109 = vld [vmem:[%s2 + $0x60] sm:$0xff]
    %v110 = vld [vmem:[%s2 + $0x68] sm:$0xff]
    %v111 = vld [vmem:[%s2 + $0x70] sm:$0xff]
    %v112 = vld [vmem:[%s2 + $0x78] sm:$0xff]
    %v113 = vld [vmem:[%s2 + $0x80] sm:$0xff]
    %v114 = vld [vmem:[%s2 + $0x88] sm:$0xff]
    %v115 = vld [vmem:[%s2 + $0x90] sm:$0xff]
    %v116 = vld [vmem:[%s2 + $0x98] sm:$0xff]
    %v117 = vld [vmem:[%s2 + $0xa0] sm:$0xff]
    %v118 = vld [vmem:[%s2 + $0xa8] sm:$0xff]
    %v119 = vld [vmem:[%s2 + $0xb0] sm:$0xff]
    %v120 = vld [vmem:[%s2 + $0xb8] sm:$0xff]
    %v121 = vld [vmem:[%s2 + $0xc0] sm:$0xff]
    %v122 = vld [vmem:[%s2 + $0xc8] sm:$0xff]
    %v123 = vld [vmem:[%s2 + $0xd0] sm:$0xff]
    %v124 = vld [vmem:[%s2 + $0xd8] sm:$0xff]
    %v125 = vld [vmem:[%s2 + $0xe0] sm:$0xff]
    %v126 = vld [vmem:[%s2 + $0xe8] sm:$0xff]
    %v127 = vld [vmem:[%s2 + $0xf0] sm:$0xff]
    %v128 = vld [vmem:[%s2 + $0xf8] sm:$0xff]
    %129 = vmatprep.subr.mxu0 %v98
    %130 = vmatpush1.msra.mxu0 %v97
    %131 = vmatprep.subr.mxu0 %v100
    %132 = vmatpush1.msra.mxu0 %v99
    %133 = vmatprep.subr.mxu0 %v102
    %134 = vmatpush1.msra.mxu0 %v101
    %135 = vmatprep.subr.mxu0 %v104
    %136 = vmatpush1.msra.mxu0 %v103
    %137 = vmatprep.subr.mxu0 %v106
    %138 = vmatpush1.msra.mxu0 %v105
    %139 = vmatprep.subr.mxu0 %v108
    %140 = vmatpush1.msra.mxu0 %v107
    %141 = vmatprep.subr.mxu0 %v110
    %142 = vmatpush1.msra.mxu0 %v109
    %143 = vmatprep.subr.mxu0 %v112
    %144 = vmatpush1.msra.mxu0 %v111
    %145 = vmatprep.subr.mxu0 %v114
    %146 = vmatpush1.msra.mxu0 %v113
    %147 = vmatprep.subr.mxu0 %v116
    %148 = vmatpush1.msra.mxu0 %v115
    %149 = vmatprep.subr.mxu0 %v118
    %150 = vmatpush1.msra.mxu0 %v117
    %151 = vmatprep.subr.mxu0 %v120
    %152 = vmatpush1.msra.mxu0 %v119
    %153 = vmatprep.subr.mxu0 %v122
    %154 = vmatpush1.msra.mxu0 %v121
    %155 = vmatprep.subr.mxu0 %v124
    %156 = vmatpush1.msra.mxu0 %v123
    %157 = vmatprep.subr.mxu0 %v126
    %158 = vmatpush1.msra.mxu0 %v125
    %159 = vmatprep.subr.mxu0 %v128
    %160 = vmatpush1.msra.mxu0 %v127
    %161 = vmatprep.subr.mxu0 0.0
    %162 = vmatpush1.msra.mxu0 0.0
    %163 = vmatprep.subr.mxu0 0.0
    %164 = vmatpush1.msra.mxu0 0.0
    %165 = vmatprep.subr.mxu0 0.0
    %166 = vmatpush1.msra.mxu0 0.0
    %167 = vmatprep.subr.mxu0 0.0
    %168 = vmatpush1.msra.mxu0 0.0
    %169 = vmatprep.subr.mxu0 0.0
    %170 = vmatpush1.msra.mxu0 0.0
    %171 = vmatprep.subr.mxu0 0.0
    %172 = vmatpush1.msra.mxu0 0.0
    %173 = vmatprep.subr.mxu0 0.0
    %174 = vmatpush1.msra.mxu0 0.0
    %175 = vmatprep.subr.mxu0 0.0
    %176 = vmatpush1.msra.mxu0 0.0
    %177 = vmatprep.subr.mxu0 0.0
    %178 = vmatpush1.msra.mxu0 0.0
    %179 = vmatprep.subr.mxu0 0.0
    %180 = vmatpush1.msra.mxu0 0.0
    %181 = vmatprep.subr.mxu0 0.0
    %182 = vmatpush1.msra.mxu0 0.0
    %183 = vmatprep.subr.mxu0 0.0
    %184 = vmatpush1.msra.mxu0 0.0
    %185 = vmatprep.subr.mxu0 0.0
    %186 = vmatpush1.msra.mxu0 0.0
    %187 = vmatprep.subr.mxu0 0.0
    %188 = vmatpush1.msra.mxu0 0.0
    %189 = vmatprep.subr.mxu0 0.0
    %190 = vmatpush1.msra.mxu0 0.0
    %191 = vmatprep.subr.mxu0 0.0
    %192 = vmatpush1.msra.mxu0 0.0
    %193 = vmatprep.mubr.f32.mxu0 0.0
    %194 = vmatmul.mubr.f32.gmra.mrb[0].mxu0 %v93
    %v195 = vpop.f32.mrb[0].mxu0
    %v196 = vadd.f32 0.0, %v195
    %v197 = vpop.f32.mrb[0].mxu0
    %v198 = vadd.f32 0.0, %v197
    %199 = vdwg.mxu0
    %v200 = vld [vmem:[#allocation2] ss:$8 sm:$0x3]
    %s201 = scalar_lea.vmem [#allocation2], 1
    %v202 = vld [vmem:[%s201] ss:$8 sm:$0x3]
    %v203 = vrot.slane %v196, 4
    %v204 = vadd.f32 %v196, %v203
    %v205 = vrot.slane %v204, 2
    %v206 = vadd.f32 %v204, %v205
    %v207 = vrot.slane %v206, 1
    %v208 = vadd.f32 %v206, %v207
    %vm209 = vcmask 523264
    %v210 = vsel %vm209, %v198, 0.0
    %v211 = vrot.slane %v210, 4
    %v212 = vadd.f32 %v210, %v211
    %v213 = vrot.slane %v212, 2
    %v214 = vadd.f32 %v212, %v213
    %v215 = vrot.slane %v214, 1
    %v216 = vadd.f32 %v214, %v215
    %v217 = vrcp.pop 8.0
    %v218 = vmul.f32 %v208, %v217
    %v219 = vmul.f32 %v216, %v217
    %v220 = vmul.f32 %v196, %v196
    %v221 = vmul.f32 %v198, %v198
    %v222 = vrot.slane %v220, 4
    %v223 = vadd.f32 %v220, %v222
    %v224 = vrot.slane %v223, 2
    %v225 = vadd.f32 %v223, %v224
    %v226 = vrot.slane %v225, 1
    %v227 = vadd.f32 %v225, %v226
    %v228 = vsel %vm209, %v221, 0.0
    %v229 = vrot.slane %v228, 4
    %v230 = vadd.f32 %v228, %v229
    %v231 = vrot.slane %v230, 2
    %v232 = vadd.f32 %v230, %v231
    %v233 = vrot.slane %v232, 1
    %v234 = vadd.f32 %v232, %v233
    %v235 = vmul.f32 %v227, %v217
    %v236 = vmul.f32 %v234, %v217
    %v237 = vmul.f32 %v218, %v218
    %v238 = vmul.f32 %v219, %v219
    %v239 = vsub.f32 %v235, %v237
    %v240 = vsub.f32 %v236, %v238
    %v241 = vadd.f32 %v239, 1e-05
    %v242 = vadd.f32 %v240, 1e-05
    %v243 = vrsqrt.pop %v241
    %v244 = vrsqrt.pop %v242
    %v247 = vcombine.low %v243, %v244
    %v249 = vunpack.c.l.s4 1966171168
    %v250 = vunpack.c.0.s8 %v249
    %v251 = vlaneseq
    %v252 = vshrl.u32 %v251, 7
    %v253 = vsub.s32 %v250, %v252
    %v254 = vrot.slane %v247, %v253
    %v256 = vunpack.c.l.s4 1966171168
    %v257 = vunpack.c.0.s8 %v256
    %v258 = vlaneseq
    %v259 = vshrl.u32 %v258, 7
    %v260 = vsub.s32 %v257, %v259
    %v261 = vrot.slane %v254, %v260
    %v263 = vmul.f32 %v200, %v261
    %v265 = vlaneseq
    %v266 = vshrl.u32 %v265, 7
    %v267 = vsub.s32 0, %v266
    %v268 = vrot.slane %v263, %v267
    %v269 = vlaneseq
    %v270 = vshrl.u32 %v269, 7
    %v271 = vsub.s32 1, %v270
    %v272 = vrot.slane %v263, %v271
    %v275 = vmul.f32 %v218, %v268
    %v276 = vmul.f32 %v219, %v272
    %v279 = vcombine.low %v275, %v276
    %v281 = vunpack.c.l.s4 1966171168
    %v282 = vunpack.c.0.s8 %v281
    %v283 = vlaneseq
    %v284 = vshrl.u32 %v283, 7
    %v285 = vsub.s32 %v282, %v284
    %v286 = vrot.slane %v279, %v285
    %v288 = vunpack.c.l.s4 1966171168
    %v289 = vunpack.c.0.s8 %v288
    %v290 = vlaneseq
    %v291 = vshrl.u32 %v290, 7
    %v292 = vsub.s32 %v289, %v291
    %v293 = vrot.slane %v286, %v292
    %v295 = vsub.f32 %v202, %v293
    %v296 = vmul.f32 %v196, %v268
    %v297 = vmul.f32 %v198, %v272
    %v299 = vlaneseq
    %v300 = vshrl.u32 %v299, 7
    %v301 = vsub.s32 0, %v300
    %v302 = vrot.slane %v295, %v301
    %v303 = vlaneseq
    %v304 = vshrl.u32 %v303, 7
    %v305 = vsub.s32 1, %v304
    %v306 = vrot.slane %v295, %v305
    %v309 = vadd.f32 %v296, %v302
    %v310 = vadd.f32 %v297, %v306
    %v311 = vmax.f32 %v309, 0.0
    %v312 = vmax.f32 %v310, 0.0
    %v313 = vld [vmem:[%s3] sm:$0xff]
    %v314 = vld [vmem:[%s3 + $0x8] sm:$0xff]
    %v315 = vld [vmem:[%s3 + $0x10] sm:$0xff]
    %v316 = vld [vmem:[%s3 + $0x18] sm:$0xff]
    %v317 = vld [vmem:[%s3 + $0x20] sm:$0xff]
    %v318 = vld [vmem:[%s3 + $0x28] sm:$0xff]
    %v319 = vld [vmem:[%s3 + $0x30] sm:$0xff]
    %v320 = vld [vmem:[%s3 + $0x38] sm:$0xff]
    %v321 = vld [vmem:[%s3 + $0x40] sm:$0xff]
    %v322 = vld [vmem:[%s3 + $0x48] sm:$0xff]
    %v323 = vld [vmem:[%s3 + $0x50] sm:$0xff]
    %v324 = vld [vmem:[%s3 + $0x58] sm:$0xff]
    %v325 = vld [vmem:[%s3 + $0x60] sm:$0xff]
    %v326 = vld [vmem:[%s3 + $0x68] sm:$0xff]
    %v327 = vld [vmem:[%s3 + $0x70] sm:$0xff]
    %v328 = vld [vmem:[%s3 + $0x78] sm:$0xff]
    %v329 = vld [vmem:[%s3 + $0x80] sm:$0xff]
    %v330 = vld [vmem:[%s3 + $0x88] sm:$0xff]
    %v331 = vld [vmem:[%s3 + $0x90] sm:$0xff]
    %v332 = vld [vmem:[%s3 + $0x98] sm:$0xff]
    %v333 = vld [vmem:[%s3 + $0xa0] sm:$0xff]
    %v334 = vld [vmem:[%s3 + $0xa8] sm:$0xff]
    %v335 = vld [vmem:[%s3 + $0xb0] sm:$0xff]
    %v336 = vld [vmem:[%s3 + $0xb8] sm:$0xff]
    %v338 = vsel %vm209, %v312, 0
    %340 = vmatprep.subr.mxu0 0.0
    %341 = vmatpush1.msra.mxu0 %v313
    %342 = vmatprep.subr.mxu0 0.0
    %343 = vmatpush1.msra.mxu0 %v314
    %344 = vmatprep.subr.mxu0 0.0
    %345 = vmatpush1.msra.mxu0 %v315
    %346 = vmatprep.subr.mxu0 0.0
    %347 = vmatpush1.msra.mxu0 %v316
    %348 = vmatprep.subr.mxu0 0.0
    %349 = vmatpush1.msra.mxu0 %v317
    %350 = vmatprep.subr.mxu0 0.0
    %351 = vmatpush1.msra.mxu0 %v318
    %352 = vmatprep.subr.mxu0 0.0
    %353 = vmatpush1.msra.mxu0 %v319
    %354 = vmatprep.subr.mxu0 0.0
    %355 = vmatpush1.msra.mxu0 %v320
    %356 = vmatprep.subr.mxu0 0.0
    %357 = vmatpush1.msra.mxu0 %v321
    %358 = vmatprep.subr.mxu0 0.0
    %359 = vmatpush1.msra.mxu0 %v322
    %360 = vmatprep.subr.mxu0 0.0
    %361 = vmatpush1.msra.mxu0 %v323
    %362 = vmatprep.subr.mxu0 0.0
    %363 = vmatpush1.msra.mxu0 %v324
    %364 = vmatprep.subr.mxu0 0.0
    %365 = vmatpush1.msra.mxu0 %v325
    %366 = vmatprep.subr.mxu0 0.0
    %367 = vmatpush1.msra.mxu0 %v326
    %368 = vmatprep.subr.mxu0 0.0
    %369 = vmatpush1.msra.mxu0 %v327
    %370 = vmatprep.subr.mxu0 0.0
    %371 = vmatpush1.msra.mxu0 %v328
    %372 = vmatprep.subr.mxu0 0.0
    %373 = vmatpush1.msra.mxu0 %v329
    %374 = vmatprep.subr.mxu0 0.0
    %375 = vmatpush1.msra.mxu0 %v330
    %376 = vmatprep.subr.mxu0 0.0
    %377 = vmatpush1.msra.mxu0 %v331
    %378 = vmatprep.subr.mxu0 0.0
    %379 = vmatpush1.msra.mxu0 %v332
    %380 = vmatprep.subr.mxu0 0.0
    %381 = vmatpush1.msra.mxu0 %v333
    %382 = vmatprep.subr.mxu0 0.0
    %383 = vmatpush1.msra.mxu0 %v334
    %384 = vmatprep.subr.mxu0 0.0
    %385 = vmatpush1.msra.mxu0 %v335
    %386 = vmatprep.subr.mxu0 0.0
    %387 = vmatpush1.msra.mxu0 %v336
    %388 = vmatprep.subr.mxu0 0.0
    %389 = vmatpush1.msra.mxu0 0.0
    %390 = vmatprep.subr.mxu0 0.0
    %391 = vmatpush1.msra.mxu0 0.0
    %392 = vmatprep.subr.mxu0 0.0
    %393 = vmatpush1.msra.mxu0 0.0
    %394 = vmatprep.subr.mxu0 0.0
    %395 = vmatpush1.msra.mxu0 0.0
    %396 = vmatprep.subr.mxu0 0.0
    %397 = vmatpush1.msra.mxu0 0.0
    %398 = vmatprep.subr.mxu0 0.0
    %399 = vmatpush1.msra.mxu0 0.0
    %400 = vmatprep.subr.mxu0 0.0
    %401 = vmatpush1.msra.mxu0 0.0
    %402 = vmatprep.subr.mxu0 0.0
    %403 = vmatpush1.msra.mxu0 0.0
    %404 = vmatprep.mubr.f32.mxu0 %v338
    %405 = vmatmul.mubr.f32.gmra.mrb[0].mxu0 %v311
    %v406 = vpop.f32.mrb[0].mxu0
    %v407 = vadd.f32 0.0, %v406
    %v408 = vpop.f32.mrb[0].mxu0
    %409 = vdwg.mxu0
    %v410 = vld [vmem:[#allocation2 + $0x2] ss:$0 sm:$0xff]
    %v411 = vld [vmem:[#allocation2 + $0x3] ss:$0 sm:$0xff]
    %vm412 = vcmask 785408
    %v413 = vsel %vm412, %v407, 0.0
    %v414 = vrot.slane %v413, 4
    %v415 = vadd.f32 %v413, %v414
    %v416 = vrot.slane %v415, 2
    %v417 = vadd.f32 %v415, %v416
    %v418 = vrot.slane %v417, 1
    %v419 = vadd.f32 %v417, %v418
    %v420 = vmul.f32 %v419, %v217
    %v421 = vmul.f32 %v407, %v407
    %v422 = vsel %vm412, %v421, 0.0
    %v423 = vrot.slane %v422, 4
    %v424 = vadd.f32 %v422, %v423
    %v425 = vrot.slane %v424, 2
    %v426 = vadd.f32 %v424, %v425
    %v427 = vrot.slane %v426, 1
    %v428 = vadd.f32 %v426, %v427
    %v429 = vmul.f32 %v428, %v217
    %v430 = vmul.f32 %v420, %v420
    %v431 = vsub.f32 %v429, %v430
    %v432 = vadd.f32 %v431, 1e-05
    %v433 = vrsqrt.pop %v432
    %v434 = vmul.f32 %v410, %v433
    %v435 = vmul.f32 %v420, %v434
    %v436 = vsub.f32 %v411, %v435
    %v437 = vmul.f32 %v407, %v434
    %v438 = vadd.f32 %v437, %v436
    %v439 = vmax.f32 %v438, 0.0
    %v440 = vld [vmem:[%s4] sm:$0xff]
    %v441 = vld [vmem:[%s4 + $0x8] sm:$0xff]
    %v442 = vld [vmem:[%s4 + $0x10] sm:$0xff]
    %v443 = vld [vmem:[%s4 + $0x18] sm:$0xff]
    %v444 = vld [vmem:[%s4 + $0x20] sm:$0xff]
    %v445 = vld [vmem:[%s4 + $0x28] sm:$0xff]
    %v446 = vld [vmem:[%s4 + $0x30] sm:$0xff]
    %v447 = vld [vmem:[%s4 + $0x38] sm:$0xff]
    %v448 = vld [vmem:[%s4 + $0x40] sm:$0xff]
    %v449 = vld [vmem:[%s4 + $0x48] sm:$0xff]
    %v450 = vld [vmem:[%s4 + $0x50] sm:$0xff]
    %v451 = vld [vmem:[%s4 + $0x58] sm:$0xff]
    %v452 = vld [vmem:[%s4 + $0x60] sm:$0xff]
    %v453 = vld [vmem:[%s4 + $0x68] sm:$0xff]
    %v454 = vld [vmem:[%s4 + $0x70] sm:$0xff]
    %v455 = vld [vmem:[%s4 + $0x78] sm:$0xff]
    %v456 = vld [vmem:[%s4 + $0x80] sm:$0xff]
    %v457 = vld [vmem:[%s4 + $0x88] sm:$0xff]
    %v458 = vld [vmem:[%s4 + $0x90] sm:$0xff]
    %v459 = vld [vmem:[%s4 + $0x98] sm:$0xff]
    %v460 = vld [vmem:[%s4 + $0xa0] sm:$0xff]
    %v461 = vld [vmem:[%s4 + $0xa8] sm:$0xff]
    %v462 = vld [vmem:[%s4 + $0xb0] sm:$0xff]
    %v463 = vld [vmem:[%s4 + $0xb8] sm:$0xff]
    %v464 = vld [vmem:[%s4 + $0xc0] sm:$0xff]
    %v465 = vld [vmem:[%s4 + $0xc8] sm:$0xff]
    %v466 = vld [vmem:[%s4 + $0xd0] sm:$0xff]
    %v467 = vld [vmem:[%s4 + $0xd8] sm:$0xff]
    %v468 = vld [vmem:[%s4 + $0xe0] sm:$0xff]
    %v469 = vld [vmem:[%s4 + $0xe8] sm:$0xff]
    %v470 = vld [vmem:[%s4 + $0xf0] sm:$0xff]
    %v471 = vld [vmem:[%s4 + $0xf8] sm:$0xff]
    %v472 = vld [vmem:[%s4 + $0x100] sm:$0xff]
    %v473 = vld [vmem:[%s4 + $0x108] sm:$0xff]
    %v474 = vld [vmem:[%s4 + $0x110] sm:$0xff]
    %v475 = vld [vmem:[%s4 + $0x118] sm:$0xff]
    %v477 = vsel %vm412, %v439, 0
    %479 = vmatprep.subr.mxu0 %v441
    %480 = vmatpush1.msra.mxu0 %v440
    %481 = vmatprep.subr.mxu0 %v444
    %482 = vmatpush1.msra.mxu0 %v443
    %483 = vmatprep.subr.mxu0 %v447
    %484 = vmatpush1.msra.mxu0 %v446
    %485 = vmatprep.subr.mxu0 %v450
    %486 = vmatpush1.msra.mxu0 %v449
    %487 = vmatprep.subr.mxu0 %v453
    %488 = vmatpush1.msra.mxu0 %v452
    %489 = vmatprep.subr.mxu0 %v456
    %490 = vmatpush1.msra.mxu0 %v455
    %491 = vmatprep.subr.mxu0 %v459
    %492 = vmatpush1.msra.mxu0 %v458
    %493 = vmatprep.subr.mxu0 %v462
    %494 = vmatpush1.msra.mxu0 %v461
    %495 = vmatprep.subr.mxu0 %v465
    %496 = vmatpush1.msra.mxu0 %v464
    %497 = vmatprep.subr.mxu0 %v468
    %498 = vmatpush1.msra.mxu0 %v467
    %499 = vmatprep.subr.mxu0 %v471
    %500 = vmatpush1.msra.mxu0 %v470
    %501 = vmatprep.subr.mxu0 %v474
    %502 = vmatpush1.msra.mxu0 %v473
    %503 = vmatprep.subr.mxu0 0.0
    %504 = vmatpush1.msra.mxu0 0.0
    %505 = vmatprep.subr.mxu0 0.0
    %506 = vmatpush1.msra.mxu0 0.0
    %507 = vmatprep.subr.mxu0 0.0
    %508 = vmatpush1.msra.mxu0 0.0
    %509 = vmatprep.subr.mxu0 0.0
    %510 = vmatpush1.msra.mxu0 0.0
    %511 = vmatprep.subr.mxu0 0.0
    %512 = vmatpush1.msra.mxu0 0.0
    %513 = vmatprep.subr.mxu0 0.0
    %514 = vmatpush1.msra.mxu0 0.0
    %515 = vmatprep.subr.mxu0 0.0
    %516 = vmatpush1.msra.mxu0 0.0
    %517 = vmatprep.subr.mxu0 0.0
    %518 = vmatpush1.msra.mxu0 0.0
    %519 = vmatprep.subr.mxu0 0.0
    %520 = vmatpush1.msra.mxu0 0.0
    %521 = vmatprep.subr.mxu0 0.0
    %522 = vmatpush1.msra.mxu0 0.0
    %523 = vmatprep.subr.mxu0 0.0
    %524 = vmatpush1.msra.mxu0 0.0
    %525 = vmatprep.subr.mxu0 0.0
    %526 = vmatpush1.msra.mxu0 0.0
    %527 = vmatprep.subr.mxu0 0.0
    %528 = vmatpush1.msra.mxu0 0.0
    %529 = vmatprep.subr.mxu0 0.0
    %530 = vmatpush1.msra.mxu0 0.0
    %531 = vmatprep.subr.mxu0 0.0
    %532 = vmatpush1.msra.mxu0 0.0
    %533 = vmatprep.subr.mxu0 0.0
    %534 = vmatpush1.msra.mxu0 0.0
    %535 = vmatprep.subr.mxu0 0.0
    %536 = vmatpush1.msra.mxu0 0.0
    %537 = vmatprep.subr.mxu0 0.0
    %538 = vmatpush1.msra.mxu0 0.0
    %539 = vmatprep.subr.mxu0 0.0
    %540 = vmatpush1.msra.mxu0 0.0
    %541 = vmatprep.subr.mxu0 0.0
    %542 = vmatpush1.msra.mxu0 0.0
    %543 = vmatprep.mubr.f32.mxu0 0.0
    %544 = vmatmul.mubr.f32.gmra.mrb[0].mxu0 %v477
    %v545 = vpop.f32.mrb[0].mxu0
    %v546 = vadd.f32 0.0, %v545
    %v547 = vpop.f32.mrb[0].mxu0
    %v548 = vadd.f32 0.0, %v547
    %549 = vdwg.mxu0
    %550 = vmatprep.subr.mxu0 0.0
    %551 = vmatpush1.msra.mxu0 %v442
    %552 = vmatprep.subr.mxu0 0.0
    %553 = vmatpush1.msra.mxu0 %v445
    %554 = vmatprep.subr.mxu0 0.0
    %555 = vmatpush1.msra.mxu0 %v448
    %556 = vmatprep.subr.mxu0 0.0
    %557 = vmatpush1.msra.mxu0 %v451
    %558 = vmatprep.subr.mxu0 0.0
    %559 = vmatpush1.msra.mxu0 %v454
    %560 = vmatprep.subr.mxu0 0.0
    %561 = vmatpush1.msra.mxu0 %v457
    %562 = vmatprep.subr.mxu0 0.0
    %563 = vmatpush1.msra.mxu0 %v460
    %564 = vmatprep.subr.mxu0 0.0
    %565 = vmatpush1.msra.mxu0 %v463
    %566 = vmatprep.subr.mxu0 0.0
    %567 = vmatpush1.msra.mxu0 %v466
    %568 = vmatprep.subr.mxu0 0.0
    %569 = vmatpush1.msra.mxu0 %v469
    %570 = vmatprep.subr.mxu0 0.0
    %571 = vmatpush1.msra.mxu0 %v472
    %572 = vmatprep.subr.mxu0 0.0
    %573 = vmatpush1.msra.mxu0 %v475
    %574 = vmatprep.subr.mxu0 0.0
    %575 = vmatpush1.msra.mxu0 0.0
    %576 = vmatprep.subr.mxu0 0.0
    %577 = vmatpush1.msra.mxu0 0.0
    %578 = vmatprep.subr.mxu0 0.0
    %579 = vmatpush1.msra.mxu0 0.0
    %580 = vmatprep.subr.mxu0 0.0
    %581 = vmatpush1.msra.mxu0 0.0
    %582 = vmatprep.subr.mxu0 0.0
    %583 = vmatpush1.msra.mxu0 0.0
    %584 = vmatprep.subr.mxu0 0.0
    %585 = vmatpush1.msra.mxu0 0.0
    %586 = vmatprep.subr.mxu0 0.0
    %587 = vmatpush1.msra.mxu0 0.0
    %588 = vmatprep.subr.mxu0 0.0
    %589 = vmatpush1.msra.mxu0 0.0
    %590 = vmatprep.subr.mxu0 0.0
    %591 = vmatpush1.msra.mxu0 0.0
    %592 = vmatprep.subr.mxu0 0.0
    %593 = vmatpush1.msra.mxu0 0.0
    %594 = vmatprep.subr.mxu0 0.0
    %595 = vmatpush1.msra.mxu0 0.0
    %596 = vmatprep.subr.mxu0 0.0
    %597 = vmatpush1.msra.mxu0 0.0
    %598 = vmatprep.subr.mxu0 0.0
    %599 = vmatpush1.msra.mxu0 0.0
    %600 = vmatprep.subr.mxu0 0.0
    %601 = vmatpush1.msra.mxu0 0.0
    %602 = vmatprep.subr.mxu0 0.0
    %603 = vmatpush1.msra.mxu0 0.0
    %604 = vmatprep.subr.mxu0 0.0
    %605 = vmatpush1.msra.mxu0 0.0
    %606 = vmatprep.subr.mxu0 0.0
    %607 = vmatpush1.msra.mxu0 0.0
    %608 = vmatprep.subr.mxu0 0.0
    %609 = vmatpush1.msra.mxu0 0.0
    %610 = vmatprep.subr.mxu0 0.0
    %611 = vmatpush1.msra.mxu0 0.0
    %612 = vmatprep.subr.mxu0 0.0
    %613 = vmatpush1.msra.mxu0 0.0
    %614 = vmatprep.mubr.f32.mxu0 0.0
    %615 = vmatmul.mubr.f32.gmra.mrb[0].mxu0 %v477
    %v616 = vpop.f32.mrb[0].mxu0
    %v617 = vadd.f32 0.0, %v616
    %v618 = vpop.f32.mrb[0].mxu0
    %619 = vdwg.mxu0
    %v620 = vld [vmem:[#allocation2 + $0x16] ss:$0 sm:$0xff]
    %v621 = vadd.f32 %v548, %v620
    %v622 = vld [vmem:[#allocation2 + $0x17] ss:$0 sm:$0xff]
    %v623 = vadd.f32 %v617, %v622
    %v624 = vmul.f32 %v623, 0.5
    %v625 = vmul.f32 %v624, 1.442695
    %v626 = vpow.pop %v625
    %v627 = vmul.f32 %v94, %v626
    %v628 = vadd.f32 %v621, %v627
    %v629 = vld [vmem:[%s5] sm:$0xff]
    %v630 = vld [vmem:[%s5 + $0x8] sm:$0xff]
    %v631 = vld [vmem:[%s5 + $0x10] sm:$0xff]
    %v632 = vld [vmem:[%s5 + $0x18] sm:$0xff]
    %vm633 = vcmask 261120
    %v635 = vsel %vm633, %v628, 0
    %637 = vmatprep.subr.mxu0 0.0
    %638 = vmatpush1.msra.mxu0 %v629
    %639 = vmatprep.subr.mxu0 0.0
    %640 = vmatpush1.msra.mxu0 %v630
    %641 = vmatprep.subr.mxu0 0.0
    %642 = vmatpush1.msra.mxu0 %v631
    %643 = vmatprep.subr.mxu0 0.0
    %644 = vmatpush1.msra.mxu0 %v632
    %645 = vmatprep.subr.mxu0 0.0
    %646 = vmatpush1.msra.mxu0 0.0
    %647 = vmatprep.subr.mxu0 0.0
    %648 = vmatpush1.msra.mxu0 0.0
    %649 = vmatprep.subr.mxu0 0.0
    %650 = vmatpush1.msra.mxu0 0.0
    %651 = vmatprep.subr.mxu0 0.0
    %652 = vmatpush1.msra.mxu0 0.0
    %653 = vmatprep.subr.mxu0 0.0
    %654 = vmatpush1.msra.mxu0 0.0
    %655 = vmatprep.subr.mxu0 0.0
    %656 = vmatpush1.msra.mxu0 0.0
    %657 = vmatprep.subr.mxu0 0.0
    %658 = vmatpush1.msra.mxu0 0.0
    %659 = vmatprep.subr.mxu0 0.0
    %660 = vmatpush1.msra.mxu0 0.0
    %661 = vmatprep.subr.mxu0 0.0
    %662 = vmatpush1.msra.mxu0 0.0
    %663 = vmatprep.subr.mxu0 0.0
    %664 = vmatpush1.msra.mxu0 0.0
    %665 = vmatprep.subr.mxu0 0.0
    %666 = vmatpush1.msra.mxu0 0.0
    %667 = vmatprep.subr.mxu0 0.0
    %668 = vmatpush1.msra.mxu0 0.0
    %669 = vmatprep.subr.mxu0 0.0
    %670 = vmatpush1.msra.mxu0 0.0
    %671 = vmatprep.subr.mxu0 0.0
    %672 = vmatpush1.msra.mxu0 0.0
    %673 = vmatprep.subr.mxu0 0.0
    %674 = vmatpush1.msra.mxu0 0.0
    %675 = vmatprep.subr.mxu0 0.0
    %676 = vmatpush1.msra.mxu0 0.0
    %677 = vmatprep.subr.mxu0 0.0
    %678 = vmatpush1.msra.mxu0 0.0
    %679 = vmatprep.subr.mxu0 0.0
    %680 = vmatpush1.msra.mxu0 0.0
    %681 = vmatprep.subr.mxu0 0.0
    %682 = vmatpush1.msra.mxu0 0.0
    %683 = vmatprep.subr.mxu0 0.0
    %684 = vmatpush1.msra.mxu0 0.0
    %685 = vmatprep.subr.mxu0 0.0
    %686 = vmatpush1.msra.mxu0 0.0
    %687 = vmatprep.subr.mxu0 0.0
    %688 = vmatpush1.msra.mxu0 0.0
    %689 = vmatprep.subr.mxu0 0.0
    %690 = vmatpush1.msra.mxu0 0.0
    %691 = vmatprep.subr.mxu0 0.0
    %692 = vmatpush1.msra.mxu0 0.0
    %693 = vmatprep.subr.mxu0 0.0
    %694 = vmatpush1.msra.mxu0 0.0
    %695 = vmatprep.subr.mxu0 0.0
    %696 = vmatpush1.msra.mxu0 0.0
    %697 = vmatprep.subr.mxu0 0.0
    %698 = vmatpush1.msra.mxu0 0.0
    %699 = vmatprep.subr.mxu0 0.0
    %700 = vmatpush1.msra.mxu0 0.0
    %701 = vmatprep.mubr.f32.mxu0 0.0
    %702 = vmatmul.mubr.f32.gmra.mrb[0].mxu0 %v635
    %v703 = vpop.f32.mrb[0].mxu0
    %v704 = vadd.f32 0.0, %v703
    %v705 = vpop.f32.mrb[0].mxu0
    %706 = vdwg.mxu0
    %v707 = vld [vmem:[#allocation2 + $0x4] ss:$0 sm:$0xff]
    %v708 = vld [vmem:[#allocation2 + $0x5] ss:$0 sm:$0xff]
    %v709 = vsel %vm633, %v704, 0.0
    %v710 = vrot.slane %v709, 4
    %v711 = vadd.f32 %v709, %v710
    %v712 = vrot.slane %v711, 2
    %v713 = vadd.f32 %v711, %v712
    %v714 = vrot.slane %v713, 1
    %v715 = vadd.f32 %v713, %v714
    %v716 = vmul.f32 %v715, %v217
    %v717 = vmul.f32 %v704, %v704
    %v718 = vsel %vm633, %v717, 0.0
    %v719 = vrot.slane %v718, 4
    %v720 = vadd.f32 %v718, %v719
    %v721 = vrot.slane %v720, 2
    %v722 = vadd.f32 %v720, %v721
    %v723 = vrot.slane %v722, 1
    %v724 = vadd.f32 %v722, %v723
    %v725 = vmul.f32 %v724, %v217
    %v726 = vmul.f32 %v716, %v716
    %v727 = vsub.f32 %v725, %v726
    %v728 = vadd.f32 %v727, 1e-05
    %v729 = vrsqrt.pop %v728
    %v730 = vmul.f32 %v707, %v729
    %v731 = vmul.f32 %v716, %v730
    %v732 = vsub.f32 %v708, %v731
    %v733 = vmul.f32 %v704, %v730
    %v734 = vadd.f32 %v733, %v732
    %v735 = vmax.f32 %v734, 0.0
    %v736 = vld [vmem:[%s6] sm:$0xff]
    %v737 = vld [vmem:[%s6 + $0x8] sm:$0xff]
    %v738 = vld [vmem:[%s6 + $0x10] sm:$0xff]
    %v739 = vld [vmem:[%s6 + $0x18] sm:$0xff]
    %v740 = vld [vmem:[%s6 + $0x20] sm:$0xff]
    %v741 = vld [vmem:[%s6 + $0x28] sm:$0xff]
    %v742 = vld [vmem:[%s6 + $0x30] sm:$0xff]
    %v743 = vld [vmem:[%s6 + $0x38] sm:$0xff]
    %v744 = vld [vmem:[%s6 + $0x40] sm:$0xff]
    %v745 = vld [vmem:[%s6 + $0x48] sm:$0xff]
    %v746 = vld [vmem:[%s6 + $0x50] sm:$0xff]
    %v747 = vld [vmem:[%s6 + $0x58] sm:$0xff]
    %v749 = vsel %vm633, %v735, 0
    %751 = vmatprep.subr.mxu0 %v737
    %752 = vmatpush1.msra.mxu0 %v736
    %753 = vmatprep.subr.mxu0 %v740
    %754 = vmatpush1.msra.mxu0 %v739
    %755 = vmatprep.subr.mxu0 %v743
    %756 = vmatpush1.msra.mxu0 %v742
    %757 = vmatprep.subr.mxu0 %v746
    %758 = vmatpush1.msra.mxu0 %v745
    %759 = vmatprep.subr.mxu0 0.0
    %760 = vmatpush1.msra.mxu0 0.0
    %761 = vmatprep.subr.mxu0 0.0
    %762 = vmatpush1.msra.mxu0 0.0
    %763 = vmatprep.subr.mxu0 0.0
    %764 = vmatpush1.msra.mxu0 0.0
    %765 = vmatprep.subr.mxu0 0.0
    %766 = vmatpush1.msra.mxu0 0.0
    %767 = vmatprep.subr.mxu0 0.0
    %768 = vmatpush1.msra.mxu0 0.0
    %769 = vmatprep.subr.mxu0 0.0
    %770 = vmatpush1.msra.mxu0 0.0
    %771 = vmatprep.subr.mxu0 0.0
    %772 = vmatpush1.msra.mxu0 0.0
    %773 = vmatprep.subr.mxu0 0.0
    %774 = vmatpush1.msra.mxu0 0.0
    %775 = vmatprep.subr.mxu0 0.0
    %776 = vmatpush1.msra.mxu0 0.0
    %777 = vmatprep.subr.mxu0 0.0
    %778 = vmatpush1.msra.mxu0 0.0
    %779 = vmatprep.subr.mxu0 0.0
    %780 = vmatpush1.msra.mxu0 0.0
    %781 = vmatprep.subr.mxu0 0.0
    %782 = vmatpush1.msra.mxu0 0.0
    %783 = vmatprep.subr.mxu0 0.0
    %784 = vmatpush1.msra.mxu0 0.0
    %785 = vmatprep.subr.mxu0 0.0
    %786 = vmatpush1.msra.mxu0 0.0
    %787 = vmatprep.subr.mxu0 0.0
    %788 = vmatpush1.msra.mxu0 0.0
    %789 = vmatprep.subr.mxu0 0.0
    %790 = vmatpush1.msra.mxu0 0.0
    %791 = vmatprep.subr.mxu0 0.0
    %792 = vmatpush1.msra.mxu0 0.0
    %793 = vmatprep.subr.mxu0 0.0
    %794 = vmatpush1.msra.mxu0 0.0
    %795 = vmatprep.subr.mxu0 0.0
    %796 = vmatpush1.msra.mxu0 0.0
    %797 = vmatprep.subr.mxu0 0.0
    %798 = vmatpush1.msra.mxu0 0.0
    %799 = vmatprep.subr.mxu0 0.0
    %800 = vmatpush1.msra.mxu0 0.0
    %801 = vmatprep.subr.mxu0 0.0
    %802 = vmatpush1.msra.mxu0 0.0
    %803 = vmatprep.subr.mxu0 0.0
    %804 = vmatpush1.msra.mxu0 0.0
    %805 = vmatprep.subr.mxu0 0.0
    %806 = vmatpush1.msra.mxu0 0.0
    %807 = vmatprep.subr.mxu0 0.0
    %808 = vmatpush1.msra.mxu0 0.0
    %809 = vmatprep.subr.mxu0 0.0
    %810 = vmatpush1.msra.mxu0 0.0
    %811 = vmatprep.subr.mxu0 0.0
    %812 = vmatpush1.msra.mxu0 0.0
    %813 = vmatprep.subr.mxu0 0.0
    %814 = vmatpush1.msra.mxu0 0.0
    %815 = vmatprep.mubr.f32.mxu0 0.0
    %816 = vmatmul.mubr.f32.gmra.mrb[0].mxu0 %v749
    %v817 = vpop.f32.mrb[0].mxu0
    %v818 = vadd.f32 0.0, %v817
    %v819 = vpop.f32.mrb[0].mxu0
    %v820 = vadd.f32 0.0, %v819
    %821 = vdwg.mxu0
    %822 = vmatprep.subr.mxu0 0.0
    %823 = vmatpush1.msra.mxu0 %v738
    %824 = vmatprep.subr.mxu0 0.0
    %825 = vmatpush1.msra.mxu0 %v741
    %826 = vmatprep.subr.mxu0 0.0
    %827 = vmatpush1.msra.mxu0 %v744
    %828 = vmatprep.subr.mxu0 0.0
    %829 = vmatpush1.msra.mxu0 %v747
    %830 = vmatprep.subr.mxu0 0.0
    %831 = vmatpush1.msra.mxu0 0.0
    %832 = vmatprep.subr.mxu0 0.0
    %833 = vmatpush1.msra.mxu0 0.0
    %834 = vmatprep.subr.mxu0 0.0
    %835 = vmatpush1.msra.mxu0 0.0
    %836 = vmatprep.subr.mxu0 0.0
    %837 = vmatpush1.msra.mxu0 0.0
    %838 = vmatprep.subr.mxu0 0.0
    %839 = vmatpush1.msra.mxu0 0.0
    %840 = vmatprep.subr.mxu0 0.0
    %841 = vmatpush1.msra.mxu0 0.0
    %842 = vmatprep.subr.mxu0 0.0
    %843 = vmatpush1.msra.mxu0 0.0
    %844 = vmatprep.subr.mxu0 0.0
    %845 = vmatpush1.msra.mxu0 0.0
    %846 = vmatprep.subr.mxu0 0.0
    %847 = vmatpush1.msra.mxu0 0.0
    %848 = vmatprep.subr.mxu0 0.0
    %849 = vmatpush1.msra.mxu0 0.0
    %850 = vmatprep.subr.mxu0 0.0
    %851 = vmatpush1.msra.mxu0 0.0
    %852 = vmatprep.subr.mxu0 0.0
    %853 = vmatpush1.msra.mxu0 0.0
    %854 = vmatprep.subr.mxu0 0.0
    %855 = vmatpush1.msra.mxu0 0.0
    %856 = vmatprep.subr.mxu0 0.0
    %857 = vmatpush1.msra.mxu0 0.0
    %858 = vmatprep.subr.mxu0 0.0
    %859 = vmatpush1.msra.mxu0 0.0
    %860 = vmatprep.subr.mxu0 0.0
    %861 = vmatpush1.msra.mxu0 0.0
    %862 = vmatprep.subr.mxu0 0.0
    %863 = vmatpush1.msra.mxu0 0.0
    %864 = vmatprep.subr.mxu0 0.0
    %865 = vmatpush1.msra.mxu0 0.0
    %866 = vmatprep.subr.mxu0 0.0
    %867 = vmatpush1.msra.mxu0 0.0
    %868 = vmatprep.subr.mxu0 0.0
    %869 = vmatpush1.msra.mxu0 0.0
    %870 = vmatprep.subr.mxu0 0.0
    %871 = vmatpush1.msra.mxu0 0.0
    %872 = vmatprep.subr.mxu0 0.0
    %873 = vmatpush1.msra.mxu0 0.0
    %874 = vmatprep.subr.mxu0 0.0
    %875 = vmatpush1.msra.mxu0 0.0
    %876 = vmatprep.subr.mxu0 0.0
    %877 = vmatpush1.msra.mxu0 0.0
    %878 = vmatprep.subr.mxu0 0.0
    %879 = vmatpush1.msra.mxu0 0.0
    %880 = vmatprep.subr.mxu0 0.0
    %881 = vmatpush1.msra.mxu0 0.0
    %882 = vmatprep.subr.mxu0 0.0
    %883 = vmatpush1.msra.mxu0 0.0
    %884 = vmatprep.subr.mxu0 0.0
    %885 = vmatpush1.msra.mxu0 0.0
    %886 = vmatprep.mubr.f32.mxu0 0.0
    %887 = vmatmul.mubr.f32.gmra.mrb[0].mxu0 %v749
    %v888 = vpop.f32.mrb[0].mxu0
    %v889 = vadd.f32 0.0, %v888
    %v890 = vpop.f32.mrb[0].mxu0
    %891 = vdwg.mxu0
    %v892 = vld [vmem:[#allocation2 + $0x6] ss:$0 sm:$0xff]
    %v893 = vld [vmem:[#allocation2 + $0x7] ss:$0 sm:$0xff]
    %v894 = vsel %vm633, %v820, 0.0
    %v895 = vrot.slane %v894, 4
    %v896 = vadd.f32 %v894, %v895
    %v897 = vrot.slane %v896, 2
    %v898 = vadd.f32 %v896, %v897
    %v899 = vrot.slane %v898, 1
    %v900 = vadd.f32 %v898, %v899
    %v901 = vmul.f32 %v900, %v217
    %v902 = vmul.f32 %v820, %v820
    %v903 = vsel %vm633, %v902, 0.0
    %v904 = vrot.slane %v903, 4
    %v905 = vadd.f32 %v903, %v904
    %v906 = vrot.slane %v905, 2
    %v907 = vadd.f32 %v905, %v906
    %v908 = vrot.slane %v907, 1
    %v909 = vadd.f32 %v907, %v908
    %v910 = vmul.f32 %v909, %v217
    %v911 = vmul.f32 %v901, %v901
    %v912 = vsub.f32 %v910, %v911
    %v913 = vadd.f32 %v912, 1e-05
    %v914 = vrsqrt.pop %v913
    %v915 = vmul.f32 %v892, %v914
    %v916 = vmul.f32 %v901, %v915
    %v917 = vsub.f32 %v893, %v916
    %v918 = vmul.f32 %v820, %v915
    %v919 = vadd.f32 %v918, %v917
    %v920 = vmax.f32 %v919, 0.0
    %v921 = vmul.f32 %v920, %v95
    %v922 = vld [vmem:[%s7] sm:$0xff]
    %v923 = vld [vmem:[%s7 + $0x8] sm:$0xff]
    %v924 = vld [vmem:[%s7 + $0x10] sm:$0xff]
    %v925 = vld [vmem:[%s7 + $0x18] sm:$0xff]
    %v927 = vsel %vm633, %v921, 0
    %929 = vmatprep.subr.mxu0 0.0
    %930 = vmatpush1.msra.mxu0 %v922
    %931 = vmatprep.subr.mxu0 0.0
    %932 = vmatpush1.msra.mxu0 %v923
    %933 = vmatprep.subr.mxu0 0.0
    %934 = vmatpush1.msra.mxu0 %v924
    %935 = vmatprep.subr.mxu0 0.0
    %936 = vmatpush1.msra.mxu0 %v925
    %937 = vmatprep.subr.mxu0 0.0
    %938 = vmatpush1.msra.mxu0 0.0
    %939 = vmatprep.subr.mxu0 0.0
    %940 = vmatpush1.msra.mxu0 0.0
    %941 = vmatprep.subr.mxu0 0.0
    %942 = vmatpush1.msra.mxu0 0.0
    %943 = vmatprep.subr.mxu0 0.0
    %944 = vmatpush1.msra.mxu0 0.0
    %945 = vmatprep.subr.mxu0 0.0
    %946 = vmatpush1.msra.mxu0 0.0
    %947 = vmatprep.subr.mxu0 0.0
    %948 = vmatpush1.msra.mxu0 0.0
    %949 = vmatprep.subr.mxu0 0.0
    %950 = vmatpush1.msra.mxu0 0.0
    %951 = vmatprep.subr.mxu0 0.0
    %952 = vmatpush1.msra.mxu0 0.0
    %953 = vmatprep.subr.mxu0 0.0
    %954 = vmatpush1.msra.mxu0 0.0
    %955 = vmatprep.subr.mxu0 0.0
    %956 = vmatpush1.msra.mxu0 0.0
    %957 = vmatprep.subr.mxu0 0.0
    %958 = vmatpush1.msra.mxu0 0.0
    %959 = vmatprep.subr.mxu0 0.0
    %960 = vmatpush1.msra.mxu0 0.0
    %961 = vmatprep.subr.mxu0 0.0
    %962 = vmatpush1.msra.mxu0 0.0
    %963 = vmatprep.subr.mxu0 0.0
    %964 = vmatpush1.msra.mxu0 0.0
    %965 = vmatprep.subr.mxu0 0.0
    %966 = vmatpush1.msra.mxu0 0.0
    %967 = vmatprep.subr.mxu0 0.0
    %968 = vmatpush1.msra.mxu0 0.0
    %969 = vmatprep.subr.mxu0 0.0
    %970 = vmatpush1.msra.mxu0 0.0
    %971 = vmatprep.subr.mxu0 0.0
    %972 = vmatpush1.msra.mxu0 0.0
    %973 = vmatprep.subr.mxu0 0.0
    %974 = vmatpush1.msra.mxu0 0.0
    %975 = vmatprep.subr.mxu0 0.0
    %976 = vmatpush1.msra.mxu0 0.0
    %977 = vmatprep.subr.mxu0 0.0
    %978 = vmatpush1.msra.mxu0 0.0
    %979 = vmatprep.subr.mxu0 0.0
    %980 = vmatpush1.msra.mxu0 0.0
    %981 = vmatprep.subr.mxu0 0.0
    %982 = vmatpush1.msra.mxu0 0.0
    %983 = vmatprep.subr.mxu0 0.0
    %984 = vmatpush1.msra.mxu0 0.0
    %985 = vmatprep.subr.mxu0 0.0
    %986 = vmatpush1.msra.mxu0 0.0
    %987 = vmatprep.subr.mxu0 0.0
    %988 = vmatpush1.msra.mxu0 0.0
    %989 = vmatprep.subr.mxu0 0.0
    %990 = vmatpush1.msra.mxu0 0.0
    %991 = vmatprep.subr.mxu0 0.0
    %992 = vmatpush1.msra.mxu0 0.0
    %993 = vmatprep.mubr.f32.mxu0 0.0
    %994 = vmatmul.mubr.f32.gmra.mrb[0].mxu0 %v927
    %v995 = vpop.f32.mrb[0].mxu0
    %v996 = vadd.f32 0.0, %v995
    %v997 = vpop.f32.mrb[0].mxu0
    %998 = vdwg.mxu0
    %v999 = vld [vmem:[#allocation2 + $0x10] ss:$0 sm:$0xff]
    %v1000 = vld [vmem:[#allocation2 + $0x11] ss:$0 sm:$0xff]
    %vm1001 = vcmask 130048
    %v1002 = vsel %vm1001, %v996, 0.0
    %v1003 = vrot.slane %v1002, 4
    %v1004 = vadd.f32 %v1002, %v1003
    %v1005 = vrot.slane %v1004, 2
    %v1006 = vadd.f32 %v1004, %v1005
    %v1007 = vrot.slane %v1006, 1
    %v1008 = vadd.f32 %v1006, %v1007
    %v1009 = vmul.f32 %v1008, %v217
    %v1010 = vmul.f32 %v996, %v996
    %v1011 = vsel %vm1001, %v1010, 0.0
    %v1012 = vrot.slane %v1011, 4
    %v1013 = vadd.f32 %v1011, %v1012
    %v1014 = vrot.slane %v1013, 2
    %v1015 = vadd.f32 %v1013, %v1014
    %v1016 = vrot.slane %v1015, 1
    %v1017 = vadd.f32 %v1015, %v1016
    %v1018 = vmul.f32 %v1017, %v217
    %v1019 = vmul.f32 %v1009, %v1009
    %v1020 = vsub.f32 %v1018, %v1019
    %v1021 = vadd.f32 %v1020, 1e-05
    %v1022 = vrsqrt.pop %v1021
    %v1023 = vmul.f32 %v999, %v1022
    %v1024 = vmul.f32 %v1009, %v1023
    %v1025 = vsub.f32 %v1000, %v1024
    %v1026 = vmul.f32 %v996, %v1023
    %v1027 = vadd.f32 %v1026, %v1025
    %v1028 = vmax.f32 %v1027, 0.0
    %v1029 = vmul.f32 %v1028, %v96
    %v1030 = vld [vmem:[#allocation2 + $0x12] ss:$0 sm:$0xff]
    %v1031 = vld [vmem:[#allocation2 + $0x13] ss:$0 sm:$0xff]
    %v1032 = vsel %vm412, %v889, 0.0
    %v1033 = vrot.slane %v1032, 4
    %v1034 = vadd.f32 %v1032, %v1033
    %v1035 = vrot.slane %v1034, 2
    %v1036 = vadd.f32 %v1034, %v1035
    %v1037 = vrot.slane %v1036, 1
    %v1038 = vadd.f32 %v1036, %v1037
    %v1039 = vmul.f32 %v1038, %v217
    %v1040 = vmul.f32 %v889, %v889
    %v1041 = vsel %vm412, %v1040, 0.0
    %v1042 = vrot.slane %v1041, 4
    %v1043 = vadd.f32 %v1041, %v1042
    %v1044 = vrot.slane %v1043, 2
    %v1045 = vadd.f32 %v1043, %v1044
    %v1046 = vrot.slane %v1045, 1
    %v1047 = vadd.f32 %v1045, %v1046
    %v1048 = vmul.f32 %v1047, %v217
    %v1049 = vmul.f32 %v1039, %v1039
    %v1050 = vsub.f32 %v1048, %v1049
    %v1051 = vadd.f32 %v1050, 1e-05
    %v1052 = vrsqrt.pop %v1051
    %v1053 = vmul.f32 %v1030, %v1052
    %v1054 = vmul.f32 %v1039, %v1053
    %v1055 = vsub.f32 %v1031, %v1054
    %v1056 = vmul.f32 %v889, %v1053
    %v1057 = vadd.f32 %v1056, %v1055
    %v1058 = vmax.f32 %v1057, 0.0
    %v1059 = vld [vmem:[#allocation6] sm:$0xff]
    %v1060 = vld [vmem:[#allocation6 + $0x8] sm:$0xff]
    %v1061 = vld [vmem:[#allocation6 + $0x10] sm:$0xff]
    %v1062 = vld [vmem:[#allocation6 + $0x18] sm:$0xff]
    %v1063 = vld [vmem:[#allocation6 + $0x20] sm:$0xff]
    %v1064 = vld [vmem:[#allocation6 + $0x28] sm:$0xff]
    %v1065 = vld [vmem:[#allocation6 + $0x30] sm:$0xff]
    %v1066 = vld [vmem:[#allocation6 + $0x38] sm:$0xff]
    %v1067 = vld [vmem:[#allocation6 + $0x40] sm:$0xff]
    %v1068 = vld [vmem:[#allocation6 + $0x48] sm:$0xff]
    %v1069 = vld [vmem:[#allocation6 + $0x50] sm:$0xff]
    %v1070 = vld [vmem:[#allocation6 + $0x58] sm:$0xff]
    %v1071 = vld [vmem:[#allocation6 + $0x60] sm:$0xff]
    %v1072 = vld [vmem:[#allocation6 + $0x68] sm:$0xff]
    %v1073 = vld [vmem:[#allocation6 + $0x70] sm:$0xff]
    %v1074 = vld [vmem:[#allocation6 + $0x78] sm:$0xff]
    %v1075 = vld [vmem:[#allocation6 + $0x80] sm:$0xff]
    %v1076 = vld [vmem:[#allocation6 + $0x88] sm:$0xff]
    %v1077 = vld [vmem:[#allocation6 + $0x90] sm:$0xff]
    %v1078 = vld [vmem:[#allocation6 + $0x98] sm:$0xff]
    %v1079 = vld [vmem:[#allocation6 + $0xa0] sm:$0xff]
    %v1080 = vld [vmem:[#allocation6 + $0xa8] sm:$0xff]
    %v1081 = vld [vmem:[#allocation6 + $0xb0] sm:$0xff]
    %v1082 = vld [vmem:[#allocation6 + $0xb8] sm:$0xff]
    %v1084 = vsel %vm412, %v1058, 0
    %1086 = vmatprep.subr.mxu0 %v1060
    %1087 = vmatpush1.msra.mxu0 %v1059
    %1088 = vmatprep.subr.mxu0 %v1062
    %1089 = vmatpush1.msra.mxu0 %v1061
    %1090 = vmatprep.subr.mxu0 %v1064
    %1091 = vmatpush1.msra.mxu0 %v1063
    %1092 = vmatprep.subr.mxu0 %v1066
    %1093 = vmatpush1.msra.mxu0 %v1065
    %1094 = vmatprep.subr.mxu0 %v1068
    %1095 = vmatpush1.msra.mxu0 %v1067
    %1096 = vmatprep.subr.mxu0 %v1070
    %1097 = vmatpush1.msra.mxu0 %v1069
    %1098 = vmatprep.subr.mxu0 %v1072
    %1099 = vmatpush1.msra.mxu0 %v1071
    %1100 = vmatprep.subr.mxu0 %v1074
    %1101 = vmatpush1.msra.mxu0 %v1073
    %1102 = vmatprep.subr.mxu0 %v1076
    %1103 = vmatpush1.msra.mxu0 %v1075
    %1104 = vmatprep.subr.mxu0 %v1078
    %1105 = vmatpush1.msra.mxu0 %v1077
    %1106 = vmatprep.subr.mxu0 %v1080
    %1107 = vmatpush1.msra.mxu0 %v1079
    %1108 = vmatprep.subr.mxu0 %v1082
    %1109 = vmatpush1.msra.mxu0 %v1081
    %1110 = vmatprep.subr.mxu0 0.0
    %1111 = vmatpush1.msra.mxu0 0.0
    %1112 = vmatprep.subr.mxu0 0.0
    %1113 = vmatpush1.msra.mxu0 0.0
    %1114 = vmatprep.subr.mxu0 0.0
    %1115 = vmatpush1.msra.mxu0 0.0
    %1116 = vmatprep.subr.mxu0 0.0
    %1117 = vmatpush1.msra.mxu0 0.0
    %1118 = vmatprep.subr.mxu0 0.0
    %1119 = vmatpush1.msra.mxu0 0.0
    %1120 = vmatprep.subr.mxu0 0.0
    %1121 = vmatpush1.msra.mxu0 0.0
    %1122 = vmatprep.subr.mxu0 0.0
    %1123 = vmatpush1.msra.mxu0 0.0
    %1124 = vmatprep.subr.mxu0 0.0
    %1125 = vmatpush1.msra.mxu0 0.0
    %1126 = vmatprep.subr.mxu0 0.0
    %1127 = vmatpush1.msra.mxu0 0.0
    %1128 = vmatprep.subr.mxu0 0.0
    %1129 = vmatpush1.msra.mxu0 0.0
    %1130 = vmatprep.subr.mxu0 0.0
    %1131 = vmatpush1.msra.mxu0 0.0
    %1132 = vmatprep.subr.mxu0 0.0
    %1133 = vmatpush1.msra.mxu0 0.0
    %1134 = vmatprep.subr.mxu0 0.0
    %1135 = vmatpush1.msra.mxu0 0.0
    %1136 = vmatprep.subr.mxu0 0.0
    %1137 = vmatpush1.msra.mxu0 0.0
    %1138 = vmatprep.subr.mxu0 0.0
    %1139 = vmatpush1.msra.mxu0 0.0
    %1140 = vmatprep.subr.mxu0 0.0
    %1141 = vmatpush1.msra.mxu0 0.0
    %1142 = vmatprep.subr.mxu0 0.0
    %1143 = vmatpush1.msra.mxu0 0.0
    %1144 = vmatprep.subr.mxu0 0.0
    %1145 = vmatpush1.msra.mxu0 0.0
    %1146 = vmatprep.subr.mxu0 0.0
    %1147 = vmatpush1.msra.mxu0 0.0
    %1148 = vmatprep.subr.mxu0 0.0
    %1149 = vmatpush1.msra.mxu0 0.0
    %1150 = vmatprep.mubr.f32.mxu0 0.0
    %1151 = vmatmul.mubr.f32.gmra.mrb[0].mxu0 %v1084
    %v1152 = vpop.f32.mrb[0].mxu0
    %v1153 = vadd.f32 0.0, %v1152
    %v1154 = vpop.f32.mrb[0].mxu0
    %v1155 = vadd.f32 0.0, %v1154
    %1156 = vdwg.mxu0
    %s1157 = scalar_lea.vmem [#allocation2], 20
    %v1158 = vld [vmem:[%s1157] ss:$8 sm:$0x3]
    %s1159 = scalar_lea.vmem [#allocation2], 21
    %v1160 = vld [vmem:[%s1159] ss:$8 sm:$0x3]
    %v1161 = vrot.slane %v1153, 4
    %v1162 = vadd.f32 %v1153, %v1161
    %v1163 = vrot.slane %v1162, 2
    %v1164 = vadd.f32 %v1162, %v1163
    %v1165 = vrot.slane %v1164, 1
    %v1166 = vadd.f32 %v1164, %v1165
    %v1167 = vsel %vm209, %v1155, 0.0
    %v1168 = vrot.slane %v1167, 4
    %v1169 = vadd.f32 %v1167, %v1168
    %v1170 = vrot.slane %v1169, 2
    %v1171 = vadd.f32 %v1169, %v1170
    %v1172 = vrot.slane %v1171, 1
    %v1173 = vadd.f32 %v1171, %v1172
    %v1174 = vmul.f32 %v1166, %v217
    %v1175 = vmul.f32 %v1173, %v217
    %v1176 = vmul.f32 %v1153, %v1153
    %v1177 = vmul.f32 %v1155, %v1155
    %v1178 = vrot.slane %v1176, 4
    %v1179 = vadd.f32 %v1176, %v1178
    %v1180 = vrot.slane %v1179, 2
    %v1181 = vadd.f32 %v1179, %v1180
    %v1182 = vrot.slane %v1181, 1
    %v1183 = vadd.f32 %v1181, %v1182
    %v1184 = vsel %vm209, %v1177, 0.0
    %v1185 = vrot.slane %v1184, 4
    %v1186 = vadd.f32 %v1184, %v1185
    %v1187 = vrot.slane %v1186, 2
    %v1188 = vadd.f32 %v1186, %v1187
    %v1189 = vrot.slane %v1188, 1
    %v1190 = vadd.f32 %v1188, %v1189
    %v1191 = vmul.f32 %v1183, %v217
    %v1192 = vmul.f32 %v1190, %v217
    %v1193 = vmul.f32 %v1174, %v1174
    %v1194 = vmul.f32 %v1175, %v1175
    %v1195 = vsub.f32 %v1191, %v1193
    %v1196 = vsub.f32 %v1192, %v1194
    %v1197 = vadd.f32 %v1195, 1e-05
    %v1198 = vadd.f32 %v1196, 1e-05
    %v1199 = vrsqrt.pop %v1197
    %v1200 = vrsqrt.pop %v1198
    %v1203 = vcombine.low %v1199, %v1200
    %v1205 = vunpack.c.l.s4 1966171168
    %v1206 = vunpack.c.0.s8 %v1205
    %v1207 = vlaneseq
    %v1208 = vshrl.u32 %v1207, 7
    %v1209 = vsub.s32 %v1206, %v1208
    %v1210 = vrot.slane %v1203, %v1209
    %v1212 = vunpack.c.l.s4 1966171168
    %v1213 = vunpack.c.0.s8 %v1212
    %v1214 = vlaneseq
    %v1215 = vshrl.u32 %v1214, 7
    %v1216 = vsub.s32 %v1213, %v1215
    %v1217 = vrot.slane %v1210, %v1216
    %v1219 = vmul.f32 %v1158, %v1217
    %v1221 = vlaneseq
    %v1222 = vshrl.u32 %v1221, 7
    %v1223 = vsub.s32 0, %v1222
    %v1224 = vrot.slane %v1219, %v1223
    %v1225 = vlaneseq
    %v1226 = vshrl.u32 %v1225, 7
    %v1227 = vsub.s32 1, %v1226
    %v1228 = vrot.slane %v1219, %v1227
    %v1231 = vmul.f32 %v1174, %v1224
    %v1232 = vmul.f32 %v1175, %v1228
    %v1235 = vcombine.low %v1231, %v1232
    %v1237 = vunpack.c.l.s4 1966171168
    %v1238 = vunpack.c.0.s8 %v1237
    %v1239 = vlaneseq
    %v1240 = vshrl.u32 %v1239, 7
    %v1241 = vsub.s32 %v1238, %v1240
    %v1242 = vrot.slane %v1235, %v1241
    %v1244 = vunpack.c.l.s4 1966171168
    %v1245 = vunpack.c.0.s8 %v1244
    %v1246 = vlaneseq
    %v1247 = vshrl.u32 %v1246, 7
    %v1248 = vsub.s32 %v1245, %v1247
    %v1249 = vrot.slane %v1242, %v1248
    %v1251 = vsub.f32 %v1160, %v1249
    %v1252 = vmul.f32 %v1153, %v1224
    %v1253 = vmul.f32 %v1155, %v1228
    %v1255 = vlaneseq
    %v1256 = vshrl.u32 %v1255, 7
    %v1257 = vsub.s32 0, %v1256
    %v1258 = vrot.slane %v1251, %v1257
    %v1259 = vlaneseq
    %v1260 = vshrl.u32 %v1259, 7
    %v1261 = vsub.s32 1, %v1260
    %v1262 = vrot.slane %v1251, %v1261
    %v1265 = vadd.f32 %v1252, %v1258
    %v1266 = vadd.f32 %v1253, %v1262
    %v1267 = vmax.f32 %v1265, 0.0
    %v1268 = vmax.f32 %v1266, 0.0
    %v1269 = vadd.f32 %v546, %v818
    %v1270 = vld [vmem:[#allocation4] sm:$0xff]
    %v1271 = vld [vmem:[#allocation4 + $0x8] sm:$0xff]
    %v1273 = vsel %vm1001, %v1029, 0
    %1275 = vmatprep.subr.mxu0 0.0
    %1276 = vmatpush1.msra.mxu0 %v1270
    %1277 = vmatprep.subr.mxu0 0.0
    %1278 = vmatpush1.msra.mxu0 %v1271
    %1279 = vmatprep.subr.mxu0 0.0
    %1280 = vmatpush1.msra.mxu0 0.0
    %1281 = vmatprep.subr.mxu0 0.0
    %1282 = vmatpush1.msra.mxu0 0.0
    %1283 = vmatprep.subr.mxu0 0.0
    %1284 = vmatpush1.msra.mxu0 0.0
    %1285 = vmatprep.subr.mxu0 0.0
    %1286 = vmatpush1.msra.mxu0 0.0
    %1287 = vmatprep.subr.mxu0 0.0
    %1288 = vmatpush1.msra.mxu0 0.0
    %1289 = vmatprep.subr.mxu0 0.0
    %1290 = vmatpush1.msra.mxu0 0.0
    %1291 = vmatprep.subr.mxu0 0.0
    %1292 = vmatpush1.msra.mxu0 0.0
    %1293 = vmatprep.subr.mxu0 0.0
    %1294 = vmatpush1.msra.mxu0 0.0
    %1295 = vmatprep.subr.mxu0 0.0
    %1296 = vmatpush1.msra.mxu0 0.0
    %1297 = vmatprep.subr.mxu0 0.0
    %1298 = vmatpush1.msra.mxu0 0.0
    %1299 = vmatprep.subr.mxu0 0.0
    %1300 = vmatpush1.msra.mxu0 0.0
    %1301 = vmatprep.subr.mxu0 0.0
    %1302 = vmatpush1.msra.mxu0 0.0
    %1303 = vmatprep.subr.mxu0 0.0
    %1304 = vmatpush1.msra.mxu0 0.0
    %1305 = vmatprep.subr.mxu0 0.0
    %1306 = vmatpush1.msra.mxu0 0.0
    %1307 = vmatprep.subr.mxu0 0.0
    %1308 = vmatpush1.msra.mxu0 0.0
    %1309 = vmatprep.subr.mxu0 0.0
    %1310 = vmatpush1.msra.mxu0 0.0
    %1311 = vmatprep.subr.mxu0 0.0
    %1312 = vmatpush1.msra.mxu0 0.0
    %1313 = vmatprep.subr.mxu0 0.0
    %1314 = vmatpush1.msra.mxu0 0.0
    %1315 = vmatprep.subr.mxu0 0.0
    %1316 = vmatpush1.msra.mxu0 0.0
    %1317 = vmatprep.subr.mxu0 0.0
    %1318 = vmatpush1.msra.mxu0 0.0
    %1319 = vmatprep.subr.mxu0 0.0
    %1320 = vmatpush1.msra.mxu0 0.0
    %1321 = vmatprep.subr.mxu0 0.0
    %1322 = vmatpush1.msra.mxu0 0.0
    %1323 = vmatprep.subr.mxu0 0.0
    %1324 = vmatpush1.msra.mxu0 0.0
    %1325 = vmatprep.subr.mxu0 0.0
    %1326 = vmatpush1.msra.mxu0 0.0
    %1327 = vmatprep.subr.mxu0 0.0
    %1328 = vmatpush1.msra.mxu0 0.0
    %1329 = vmatprep.subr.mxu0 0.0
    %1330 = vmatpush1.msra.mxu0 0.0
    %1331 = vmatprep.subr.mxu0 0.0
    %1332 = vmatpush1.msra.mxu0 0.0
    %1333 = vmatprep.subr.mxu0 0.0
    %1334 = vmatpush1.msra.mxu0 0.0
    %1335 = vmatprep.subr.mxu0 0.0
    %1336 = vmatpush1.msra.mxu0 0.0
    %1337 = vmatprep.subr.mxu0 0.0
    %1338 = vmatpush1.msra.mxu0 0.0
    %1339 = vmatprep.mubr.f32.mxu0 0.0
    %1340 = vmatmul.mubr.f32.gmra.mrb[0].mxu0 %v1273
    %v1341 = vpop.f32.mrb[0].mxu0
    %v1342 = vadd.f32 0.0, %v1341
    %v1343 = vpop.f32.mrb[0].mxu0
    %1344 = vdwg.mxu0
    %v1345 = vadd.f32 %v1269, %v1342
    %v1346 = vld [vmem:[#allocation7] sm:$0xff]
    %v1347 = vld [vmem:[#allocation7 + $0x8] sm:$0xff]
    %v1348 = vld [vmem:[#allocation7 + $0x10] sm:$0xff]
    %v1349 = vld [vmem:[#allocation7 + $0x18] sm:$0xff]
    %v1350 = vld [vmem:[#allocation7 + $0x20] sm:$0xff]
    %v1351 = vld [vmem:[#allocation7 + $0x28] sm:$0xff]
    %v1352 = vld [vmem:[#allocation7 + $0x30] sm:$0xff]
    %v1353 = vld [vmem:[#allocation7 + $0x38] sm:$0xff]
    %v1354 = vld [vmem:[#allocation7 + $0x40] sm:$0xff]
    %v1355 = vld [vmem:[#allocation7 + $0x48] sm:$0xff]
    %v1356 = vld [vmem:[#allocation7 + $0x50] sm:$0xff]
    %v1357 = vld [vmem:[#allocation7 + $0x58] sm:$0xff]
    %v1358 = vld [vmem:[#allocation7 + $0x60] sm:$0xff]
    %v1359 = vld [vmem:[#allocation7 + $0x68] sm:$0xff]
    %v1360 = vld [vmem:[#allocation7 + $0x70] sm:$0xff]
    %v1361 = vld [vmem:[#allocation7 + $0x78] sm:$0xff]
    %v1362 = vld [vmem:[#allocation7 + $0x80] sm:$0xff]
    %v1363 = vld [vmem:[#allocation7 + $0x88] sm:$0xff]
    %v1364 = vld [vmem:[#allocation7 + $0x90] sm:$0xff]
    %v1365 = vld [vmem:[#allocation7 + $0x98] sm:$0xff]
    %v1366 = vld [vmem:[#allocation7 + $0xa0] sm:$0xff]
    %v1367 = vld [vmem:[#allocation7 + $0xa8] sm:$0xff]
    %v1368 = vld [vmem:[#allocation7 + $0xb0] sm:$0xff]
    %v1369 = vld [vmem:[#allocation7 + $0xb8] sm:$0xff]
    %v1371 = vsel %vm209, %v1268, 0
    %1373 = vmatprep.subr.mxu0 0.0
    %1374 = vmatpush1.msra.mxu0 %v1346
    %1375 = vmatprep.subr.mxu0 0.0
    %1376 = vmatpush1.msra.mxu0 %v1347
    %1377 = vmatprep.subr.mxu0 0.0
    %1378 = vmatpush1.msra.mxu0 %v1348
    %1379 = vmatprep.subr.mxu0 0.0
    %1380 = vmatpush1.msra.mxu0 %v1349
    %1381 = vmatprep.subr.mxu0 0.0
    %1382 = vmatpush1.msra.mxu0 %v1350
    %1383 = vmatprep.subr.mxu0 0.0
    %1384 = vmatpush1.msra.mxu0 %v1351
    %1385 = vmatprep.subr.mxu0 0.0
    %1386 = vmatpush1.msra.mxu0 %v1352
    %1387 = vmatprep.subr.mxu0 0.0
    %1388 = vmatpush1.msra.mxu0 %v1353
    %1389 = vmatprep.subr.mxu0 0.0
    %1390 = vmatpush1.msra.mxu0 %v1354
    %1391 = vmatprep.subr.mxu0 0.0
    %1392 = vmatpush1.msra.mxu0 %v1355
    %1393 = vmatprep.subr.mxu0 0.0
    %1394 = vmatpush1.msra.mxu0 %v1356
    %1395 = vmatprep.subr.mxu0 0.0
    %1396 = vmatpush1.msra.mxu0 %v1357
    %1397 = vmatprep.subr.mxu0 0.0
    %1398 = vmatpush1.msra.mxu0 %v1358
    %1399 = vmatprep.subr.mxu0 0.0
    %1400 = vmatpush1.msra.mxu0 %v1359
    %1401 = vmatprep.subr.mxu0 0.0
    %1402 = vmatpush1.msra.mxu0 %v1360
    %1403 = vmatprep.subr.mxu0 0.0
    %1404 = vmatpush1.msra.mxu0 %v1361
    %1405 = vmatprep.subr.mxu0 0.0
    %1406 = vmatpush1.msra.mxu0 %v1362
    %1407 = vmatprep.subr.mxu0 0.0
    %1408 = vmatpush1.msra.mxu0 %v1363
    %1409 = vmatprep.subr.mxu0 0.0
    %1410 = vmatpush1.msra.mxu0 %v1364
    %1411 = vmatprep.subr.mxu0 0.0
    %1412 = vmatpush1.msra.mxu0 %v1365
    %1413 = vmatprep.subr.mxu0 0.0
    %1414 = vmatpush1.msra.mxu0 %v1366
    %1415 = vmatprep.subr.mxu0 0.0
    %1416 = vmatpush1.msra.mxu0 %v1367
    %1417 = vmatprep.subr.mxu0 0.0
    %1418 = vmatpush1.msra.mxu0 %v1368
    %1419 = vmatprep.subr.mxu0 0.0
    %1420 = vmatpush1.msra.mxu0 %v1369
    %1421 = vmatprep.subr.mxu0 0.0
    %1422 = vmatpush1.msra.mxu0 0.0
    %1423 = vmatprep.subr.mxu0 0.0
    %1424 = vmatpush1.msra.mxu0 0.0
    %1425 = vmatprep.subr.mxu0 0.0
    %1426 = vmatpush1.msra.mxu0 0.0
    %1427 = vmatprep.subr.mxu0 0.0
    %1428 = vmatpush1.msra.mxu0 0.0
    %1429 = vmatprep.subr.mxu0 0.0
    %1430 = vmatpush1.msra.mxu0 0.0
    %1431 = vmatprep.subr.mxu0 0.0
    %1432 = vmatpush1.msra.mxu0 0.0
    %1433 = vmatprep.subr.mxu0 0.0
    %1434 = vmatpush1.msra.mxu0 0.0
    %1435 = vmatprep.subr.mxu0 0.0
    %1436 = vmatpush1.msra.mxu0 0.0
    %1437 = vmatprep.mubr.f32.mxu0 %v1371
    %1438 = vmatmul.mubr.f32.gmra.mrb[0].mxu0 %v1267
    %v1439 = vpop.f32.mrb[0].mxu0
    %v1440 = vadd.f32 0.0, %v1439
    %v1441 = vpop.f32.mrb[0].mxu0
    %1442 = vdwg.mxu0
    %v1443 = vadd.f32 %v1345, %v1440
    %v1444 = vld [vmem:[#allocation2 + $0x20] ss:$0 sm:$0xff]
    %v1445 = vadd.f32 %v1443, %v1444
    %1446 = vst [vmem:[%s11] sm:$0xff] %v1445
    // Predicated region
    $region62: #{mi_vae_forward.1} parent=1 // pred_check
      _
    $region63: #{mi_vae_forward.1} parent=1 // pred_check_branch
      %1448 = sbr.rel (0) target = $region65
    $region64: #{mi_vae_forward.1} parent=1 // pred_region
      _
    $region65: #{mi_vae_forward.1} parent=1 // pred_fallthru
      _
    // Predicated region
    $region66: #{mi_vae_forward.1} parent=1 // pred_check
      _
    $region67: #{mi_vae_forward.1} parent=1 // pred_check_branch
      %1450 = sbr.rel (0) target = $region69
    $region68: #{mi_vae_forward.1} parent=1 // pred_region
      _
    $region69: #{mi_vae_forward.1} parent=1 // pred_fallthru
      _
    %1451 = vsyncpa [#allocation3], 1
    %1452 = vsyncpa [#allocation5], 1
    %1453 = vsyncpa [#allocation8], 1

</llo_original>
